<compile_context>
chip_gen: v7x
topology: tpu7x:2x2x1
jax: 0.10.0
libtpu: 0.0.40
codegen_flags: <defaults>
</compile_context>

<pallas_src>
import functools
import math

import jax
import jax.numpy as jnp
from jax.experimental import pallas as pl
from jax.experimental.pallas import tpu as pltpu


# Scoped-VMEM allowance: below v7x's 64 MiB physical per-TC VMEM, comfortable
# for the tiled working sets here; raise on v5e/v6e (128 MiB) for larger tiles.
_VMEM_LIMIT_BYTES = 48 * 1024 * 1024

_LN_EPS = 1e-5


def _cparams(semantics):
    return pltpu.CompilerParams(
        dimension_semantics=semantics,
        vmem_limit_bytes=_VMEM_LIMIT_BYTES,
    )


def _layer_norm_f32(x, gamma, beta, eps):
    xf = x.astype(jnp.float32)
    mu = jnp.mean(xf, axis=-1, keepdims=True)
    var = jnp.mean(jnp.square(xf - mu), axis=-1, keepdims=True)
    xn = (xf - mu) * jax.lax.rsqrt(var + eps)
    return xn * gamma.astype(jnp.float32) + beta.astype(jnp.float32)


# ---------------------------------------------------------------------------
# K/V projection kernel (hoisted out of the flash loop).
# Grid: (batch, kv_tiles).  Optionally applies LayerNorm (self-attention case).
# Outputs K, V in (B, Skv, H, Dh) layout so the flash kernel streams them with
# no per-step reshape.
# ---------------------------------------------------------------------------

def _kv_proj_kernel(*refs, num_heads, head_dim, ln, eps):
    if ln:
        kv_ref, g_ref, b_ref, wk_ref, wv_ref, k_out_ref, v_out_ref = refs
    else:
        kv_ref, wk_ref, wv_ref, k_out_ref, v_out_ref = refs

    cdt = kv_ref.dtype
    kv = kv_ref[0]                                              # (TKV, Dkv)
    if ln:
        kv = _layer_norm_f32(kv, g_ref[...], b_ref[...], eps).astype(cdt)

    tkv = kv.shape[0]
    k = jnp.dot(kv, wk_ref[...], preferred_element_type=jnp.float32)   # (TKV, H*Dh)
    v = jnp.dot(kv, wv_ref[...], preferred_element_type=jnp.float32)
    k_out_ref[0] = k.astype(k_out_ref.dtype).reshape(tkv, num_heads, head_dim)
    v_out_ref[0] = v.astype(v_out_ref.dtype).reshape(tkv, num_heads, head_dim)


def _project_kv(kv_source, gamma, beta, wk, wv, *, num_heads, head_dim, ln,
                kv_tile, eps):
    B, Skv, Dkv = kv_source.shape
    inner = num_heads * head_dim
    TKV = min(kv_tile, Skv)
    assert Skv % TKV == 0, "kv sequence length must divide the kv tile size"

    in_specs = [pl.BlockSpec((1, TKV, Dkv), lambda b, ki: (b, ki, 0))]
    args = [kv_source]
    if ln:
        in_specs += [pl.BlockSpec((1, Dkv), lambda b, ki: (0, 0)),
                     pl.BlockSpec((1, Dkv), lambda b, ki: (0, 0))]
        args += [gamma, beta]
    in_specs += [pl.BlockSpec((Dkv, inner), lambda b, ki: (0, 0)),
                 pl.BlockSpec((Dkv, inner), lambda b, ki: (0, 0))]
    args += [wk, wv]

    kv_shape = jax.ShapeDtypeStruct((B, Skv, num_heads, head_dim), kv_source.dtype)
    kv_spec = pl.BlockSpec((1, TKV, num_heads, head_dim), lambda b, ki: (b, ki, 0, 0))

    kernel = functools.partial(_kv_proj_kernel, num_heads=num_heads,
                               head_dim=head_dim, ln=ln, eps=eps)
    return pl.pallas_call(
        kernel,
        out_shape=(kv_shape, kv_shape),
        grid=(B, Skv // TKV),
        in_specs=in_specs,
        out_specs=(kv_spec, kv_spec),
        compiler_params=_cparams(("parallel", "parallel")),
    )(*args)


# ---------------------------------------------------------------------------
# Fused LayerNorm(Q) + flash attention over precomputed K/V + output
# projection + residual add.
# Grid: (batch, q_tiles, kv_tiles); online softmax over the kv axis.
# ---------------------------------------------------------------------------

def _flash_attn_kernel(x_ref, k_ref, v_ref, g_ref, b_ref, wq_ref, wo_ref, bo_ref,
                       o_ref, q_sc, m_sc, l_sc, acc_sc,
                       *, num_heads, head_dim, scale, eps):
    ki = pl.program_id(2)
    cdt = x_ref.dtype            # compute dtype (f32 or bf16); MXU accum is f32

    # ---- per-(b, q_tile) init: LayerNorm + Q projection (+ f32 scale) + stats.
    # NOTE: acc/m/l scratch persists across grid steps and is re-initialized at
    # ki == 0; this relies on the kv axis being the innermost ("arbitrary") one.
    @pl.when(ki == 0)
    def _():
        xn = _layer_norm_f32(x_ref[0], g_ref[...], b_ref[...], eps).astype(cdt)
        q = jnp.dot(xn, wq_ref[...], preferred_element_type=jnp.float32) * scale
        q_sc[...] = q.astype(cdt).reshape(q_sc.shape)            # (TQ, H, Dh)
        m_sc[...] = jnp.full(m_sc.shape, -jnp.inf, jnp.float32)
        l_sc[...] = jnp.zeros(l_sc.shape, jnp.float32)
        acc_sc[...] = jnp.zeros(acc_sc.shape, jnp.float32)

    k = k_ref[0]                                                 # (TKV, H, Dh)
    v = v_ref[0]                                                 # (TKV, H, Dh)

    # ---- batched-head scores + online softmax update
    s = jnp.einsum('qhd,khd->hqk', q_sc[...], k,
                   preferred_element_type=jnp.float32)           # (H, TQ, TKV)
    m_prev = m_sc[...]
    m_new = jnp.maximum(m_prev, jnp.max(s, axis=-1, keepdims=True))
    alpha = jnp.exp(m_prev - m_new)
    p = jnp.exp(s - m_new)
    l_sc[...] = alpha * l_sc[...] + jnp.sum(p, axis=-1, keepdims=True)
    acc_sc[...] = alpha * acc_sc[...] + jnp.einsum(
        'hqk,khd->hqd', p.astype(cdt), v, preferred_element_type=jnp.float32)
    m_sc[...] = m_new

    # ---- finalize: exact normalize, single full-depth output projection,
    #      +bias +residual.
    @pl.when(ki == pl.num_programs(2) - 1)
    def _():
        o_n = (acc_sc[...] / l_sc[...]).astype(cdt)              # (H, TQ, Dh)
        # Concatenate heads along lanes -> (TQ, H*Dh); column h*Dh+d matches
        # wo's (inner, D) row ordering, so one matmul with full contraction.
        o_cat = jnp.concatenate([o_n[h] for h in range(num_heads)], axis=-1)
        out = jnp.dot(o_cat, wo_ref[...], preferred_element_type=jnp.float32)
        out = out + bo_ref[...].astype(jnp.float32) + x_ref[0].astype(jnp.float32)
        o_ref[0] = out.astype(o_ref.dtype)


def fused_attention(hidden_states, kv_source, gamma, beta, wq, wk, wv, wo, bo, *,
                    num_heads, head_dim, ln_kv, q_tile=128, kv_tile=128,
                    eps=_LN_EPS):
    """LayerNorm(hidden) -> MHA(q=LN(hidden), kv=kv_source [LN'd if self-attn])
    -> output projection -> +residual."""
    B, Sq, D = hidden_states.shape
    _, Skv, _ = kv_source.shape
    inner = num_heads * head_dim

    TQ = min(q_tile, Sq)
    TKV = min(kv_tile, Skv)
    assert Sq % TQ == 0 and Skv % TKV == 0, "sequence lengths must divide tiles"

    # K/V projection hoisted out of the flash loop (once per batch/kv-tile).
    k_proj, v_proj = _project_kv(kv_source, gamma, beta, wk, wv,
                                 num_heads=num_heads, head_dim=head_dim,
                                 ln=ln_kv, kv_tile=kv_tile, eps=eps)

    scale = 1.0 / math.sqrt(head_dim)
    kernel = functools.partial(_flash_attn_kernel, num_heads=num_heads,
                               head_dim=head_dim, scale=scale, eps=eps)
    grid = (B, Sq // TQ, Skv // TKV)

    return pl.pallas_call(
        kernel,
        out_shape=jax.ShapeDtypeStruct((B, Sq, D), hidden_states.dtype),
        grid=grid,
        in_specs=[
            pl.BlockSpec((1, TQ, D), lambda b, qi, ki: (b, qi, 0)),        # hidden (Q + residual)
            pl.BlockSpec((1, TKV, num_heads, head_dim),
                         lambda b, qi, ki: (b, ki, 0, 0)),                 # K (projected)
            pl.BlockSpec((1, TKV, num_heads, head_dim),
                         lambda b, qi, ki: (b, ki, 0, 0)),                 # V (projected)
            pl.BlockSpec((1, D), lambda b, qi, ki: (0, 0)),                # LN gamma
            pl.BlockSpec((1, D), lambda b, qi, ki: (0, 0)),                # LN beta
            pl.BlockSpec((D, inner), lambda b, qi, ki: (0, 0)),            # wq
            pl.BlockSpec((inner, D), lambda b, qi, ki: (0, 0)),            # wo
            pl.BlockSpec((1, D), lambda b, qi, ki: (0, 0)),                # bo
        ],
        out_specs=pl.BlockSpec((1, TQ, D), lambda b, qi, ki: (b, qi, 0)),
        scratch_shapes=[
            pltpu.VMEM((TQ, num_heads, head_dim), hidden_states.dtype),    # Q tile (TQ,H,Dh)
            pltpu.VMEM((num_heads, TQ, 1), jnp.float32),                   # running max
            pltpu.VMEM((num_heads, TQ, 1), jnp.float32),                   # running sum
            pltpu.VMEM((num_heads, TQ, head_dim), jnp.float32),            # running acc
        ],
        compiler_params=_cparams(("parallel", "parallel", "arbitrary")),
    )(hidden_states, k_proj, v_proj, gamma, beta, wq, wo, bo)


# ---------------------------------------------------------------------------
# Fused LayerNorm + GEGLU feed-forward + residual add.
# Grid: (batch, seq_tiles, inner_tiles); inner dim reduced into a VMEM accumulator.
# ---------------------------------------------------------------------------

def _geglu_ff_kernel(x_ref, g_ref, b_ref, w1h_ref, b1h_ref, w1g_ref, b1g_ref,
                     w2_ref, b2_ref, o_ref, xn_sc, acc_sc, *, eps):
    ni = pl.program_id(2)
    cdt = x_ref.dtype

    # Normalize once per (b, seq_tile); reuse across inner tiles.
    @pl.when(ni == 0)
    def _():
        xn_sc[...] = _layer_norm_f32(x_ref[0], g_ref[...], b_ref[...], eps).astype(cdt)
        acc_sc[...] = jnp.zeros(acc_sc.shape, jnp.float32)

    xn = xn_sc[...]
    h = jnp.dot(xn, w1h_ref[...], preferred_element_type=jnp.float32)
    h = h + b1h_ref[...].astype(jnp.float32)                              # (TS, TI)
    gate = jnp.dot(xn, w1g_ref[...], preferred_element_type=jnp.float32)
    gate = gate + b1g_ref[...].astype(jnp.float32)                        # (TS, TI)
    # exact erf GELU, matching F.gelu default
    gate = 0.5 * gate * (1.0 + jax.lax.erf(gate * (1.0 / math.sqrt(2.0))))
    y = (h * gate).astype(cdt)
    acc_sc[...] += jnp.dot(y, w2_ref[...], preferred_element_type=jnp.float32)

    @pl.when(ni == pl.num_programs(2) - 1)
    def _():
        out = acc_sc[...] + b2_ref[...].astype(jnp.float32) + x_ref[0].astype(jnp.float32)
        o_ref[0] = out.astype(o_ref.dtype)


def fused_geglu_ff(hidden_states, gamma, beta, w1, b1, w2, b2, *,
                   inner_dim, s_tile=256, inner_tile=512, eps=_LN_EPS):
    """LayerNorm(hidden) -> GEGLU(Linear) -> Linear -> +residual, inner dim tiled."""
    B, S, D = hidden_states.shape
    TS = min(s_tile, S)
    TI = min(inner_tile, inner_dim)
    assert S % TS == 0 and inner_dim % TI == 0

    # Split the GEGLU projection into separate hidden / gate matrices in the
    # wrapper so the kernel never slices at a non-lane-aligned boundary.
    w1h, w1g = w1[:, :inner_dim], w1[:, inner_dim:]
    b1h, b1g = b1[:, :inner_dim], b1[:, inner_dim:]

    kernel = functools.partial(_geglu_ff_kernel, eps=eps)
    grid = (B, S // TS, inner_dim // TI)

    return pl.pallas_call(
        kernel,
        out_shape=jax.ShapeDtypeStruct((B, S, D), hidden_states.dtype),
        grid=grid,
        in_specs=[
            pl.BlockSpec((1, TS, D), lambda b, si, ni: (b, si, 0)),     # hidden (LN + residual)
            pl.BlockSpec((1, D), lambda b, si, ni: (0, 0)),             # LN gamma
            pl.BlockSpec((1, D), lambda b, si, ni: (0, 0)),             # LN beta
            pl.BlockSpec((D, TI), lambda b, si, ni: (0, ni)),           # w1 hidden tile
            pl.BlockSpec((1, TI), lambda b, si, ni: (0, ni)),           # b1 hidden tile
            pl.BlockSpec((D, TI), lambda b, si, ni: (0, ni)),           # w1 gate tile
            pl.BlockSpec((1, TI), lambda b, si, ni: (0, ni)),           # b1 gate tile
            pl.BlockSpec((TI, D), lambda b, si, ni: (ni, 0)),           # w2 tile
            pl.BlockSpec((1, D), lambda b, si, ni: (0, 0)),             # b2
        ],
        out_specs=pl.BlockSpec((1, TS, D), lambda b, si, ni: (b, si, 0)),
        scratch_shapes=[
            pltpu.VMEM((TS, D), hidden_states.dtype),                   # normalized x
            pltpu.VMEM((TS, D), jnp.float32),                           # output accumulator
        ],
        compiler_params=_cparams(("parallel", "parallel", "arbitrary")),
    )(hidden_states, gamma, beta, w1h, b1h, w1g, b1g, w2, b2)


# ---------------------------------------------------------------------------
# BasicTransformerBlock forward.
# ---------------------------------------------------------------------------

def basic_transformer_block_forward(params, hidden_states, encoder_hidden_states,
                                    pixelwise_hidden_state, *, num_heads, head_dim,
                                    q_tile=128, kv_tile=128,
                                    ff_s_tile=256, ff_inner_tile=512):
    # TODO(synk): ada_norm / ada_norm_zero timestep paths, GLIGEN 'gated' fuser,
    # attention masks, dropout and chunked feed-forward are not exercised by the
    # default config and are not implemented here.

    # 1. norm1 + self-attention + residual (kv source is hidden_states, LN'd too)
    hidden_states = fused_attention(
        hidden_states, hidden_states, params["norm1_g"], params["norm1_b"],
        params["attn1_wq"], params["attn1_wk"], params["attn1_wv"],
        params["attn1_wo"], params["attn1_bo"],
        num_heads=num_heads, head_dim=head_dim, ln_kv=True,
        q_tile=q_tile, kv_tile=kv_tile)

    # 2. norm2 + cross-attention (encoder_hidden_states) + residual
    hidden_states = fused_attention(
        hidden_states, encoder_hidden_states, params["norm2_g"], params["norm2_b"],
        params["attn2_wq"], params["attn2_wk"], params["attn2_wv"],
        params["attn2_wo"], params["attn2_bo"],
        num_heads=num_heads, head_dim=head_dim, ln_kv=False,
        q_tile=q_tile, kv_tile=kv_tile)

    # 3. norm2_plus + pixelwise cross-attention + residual
    hidden_states = fused_attention(
        hidden_states, pixelwise_hidden_state, params["norm2p_g"], params["norm2p_b"],
        params["attn2p_wq"], params["attn2p_wk"], params["attn2p_wv"],
        params["attn2p_wo"], params["attn2p_bo"],
        num_heads=num_heads, head_dim=head_dim, ln_kv=False,
        q_tile=q_tile, kv_tile=kv_tile)

    # 4. norm3 + GEGLU feed-forward + residual
    ff_inner = params["ff_w2"].shape[0]
    hidden_states = fused_geglu_ff(
        hidden_states, params["norm3_g"], params["norm3_b"],
        params["ff_w1"], params["ff_b1"], params["ff_w2"], params["ff_b2"],
        inner_dim=ff_inner, s_tile=ff_s_tile, inner_tile=ff_inner_tile)

    return hidden_states


# ---------------------------------------------------------------------------
# Deterministic parameter construction
# ---------------------------------------------------------------------------

def init_params(key, dim, num_heads, head_dim, cross_dim, px_dim, mult=4):
    inner = num_heads * head_dim
    ff_inner = dim * mult
    ks = iter(jax.random.split(key, 40))

    def w(shape, scale=0.02):
        return (scale * jax.random.normal(next(ks), shape)).astype(jnp.float32)

    def zeros(shape):
        return jnp.zeros(shape, jnp.float32)

    def ones(shape):
        return jnp.ones(shape, jnp.float32)

    return {
        # LayerNorms (elementwise_affine=True)
        "norm1_g": ones((1, dim)), "norm1_b": zeros((1, dim)),
        "norm2_g": ones((1, dim)), "norm2_b": zeros((1, dim)),
        "norm2p_g": ones((1, dim)), "norm2p_b": zeros((1, dim)),
        "norm3_g": ones((1, dim)), "norm3_b": zeros((1, dim)),
        # attn1: self attention (q/k/v from dim)
        "attn1_wq": w((dim, inner)), "attn1_wk": w((dim, inner)),
        "attn1_wv": w((dim, inner)), "attn1_wo": w((inner, dim)),
        "attn1_bo": zeros((1, dim)),
        # attn2: cross attention (k/v from cross_dim)
        "attn2_wq": w((dim, inner)), "attn2_wk": w((cross_dim, inner)),
        "attn2_wv": w((cross_dim, inner)), "attn2_wo": w((inner, dim)),
        "attn2_bo": zeros((1, dim)),
        # attn2_plus: pixelwise cross attention (k/v from px_dim)
        "attn2p_wq": w((dim, inner)), "attn2p_wk": w((px_dim, inner)),
        "attn2p_wv": w((px_dim, inner)), "attn2p_wo": w((inner, dim)),
        "attn2p_bo": zeros((1, dim)),
        # feed forward: GEGLU proj (dim -> 2*ff_inner) then Linear(ff_inner -> dim)
        "ff_w1": w((dim, 2 * ff_inner)), "ff_b1": zeros((1, 2 * ff_inner)),
        "ff_w2": w((ff_inner, dim)), "ff_b2": zeros((1, dim)),
    }


# ---------------------------------------------------------------------------
# Main
# ---------------------------------------------------------------------------

if __name__ == "__main__":
    # Small but lane-aligned shapes (D multiple of 128 -> dense vector stores).
    B = 2            # batch
    S = 128          # token sequence length
    DIM = 128        # channel dim
    HEADS = 2
    HEAD_DIM = 64
    CROSS_DIM = 64   # encoder_hidden_states dim
    PX_DIM = 128     # pixelwise_hidden_state dim
    S_ENC = 64       # encoder sequence length
    S_PX = 128       # pixelwise sequence length

    key = jax.random.PRNGKey(0)
    k_params, k_x, k_enc, k_px = jax.random.split(key, 4)

    params = init_params(k_params, DIM, HEADS, HEAD_DIM, CROSS_DIM, PX_DIM)

    hidden_states = jax.random.normal(k_x, (B, S, DIM), dtype=jnp.float32)
    encoder_hidden_states = jax.random.normal(k_enc, (B, S_ENC, CROSS_DIM), dtype=jnp.float32)
    pixelwise_hidden_state = jax.random.normal(k_px, (B, S_PX, PX_DIM), dtype=jnp.float32)

    # Small tiles so the q-tiling / online-softmax / FF-inner accumulation paths
    # are all exercised (production: q_tile/kv_tile ~128-256, ff tiles 256-1024).
    fwd = functools.partial(basic_transformer_block_forward,
                            num_heads=HEADS, head_dim=HEAD_DIM,
                            q_tile=64, kv_tile=64, ff_s_tile=64, ff_inner_tile=256)

    # f32 run (matches the PyTorch module's default dtype)
    out = fwd(params, hidden_states, encoder_hidden_states, pixelwise_hidden_state)
    out = jax.block_until_ready(out)
    assert out.shape == (B, S, DIM)
    assert jnp.all(jnp.isfinite(out))

    # bf16 run (matmul operands stay bf16; LN/softmax stats & accumulation in f32)
    params_bf16 = jax.tree_util.tree_map(lambda a: a.astype(jnp.bfloat16), params)
    out_bf16 = fwd(params_bf16,
                   hidden_states.astype(jnp.bfloat16),
                   encoder_hidden_states.astype(jnp.bfloat16),
                   pixelwise_hidden_state.astype(jnp.bfloat16))
    out_bf16 = jax.block_until_ready(out_bf16)
    assert out_bf16.shape == (B, S, DIM)
    assert jnp.all(jnp.isfinite(out_bf16.astype(jnp.float32)))

    print("KERNEL_OK")
</pallas_src>

<mosaic_0001>
module attributes {stable_mosaic.version = 11 : i64} {
  func.func @_kv_proj_kernel(%arg0: i32, %arg1: i32, %arg2: memref<1x64x128xf32, #tpu.memory_space<vmem>>, %arg3: memref<1x128xf32, #tpu.memory_space<vmem>>, %arg4: memref<1x128xf32, #tpu.memory_space<vmem>>, %arg5: memref<128x128xf32, #tpu.memory_space<vmem>>, %arg6: memref<128x128xf32, #tpu.memory_space<vmem>>, %arg7: memref<1x64x2x64xf32, #tpu.memory_space<vmem>>, %arg8: memref<1x64x2x64xf32, #tpu.memory_space<vmem>>) attributes {dimension_semantics = [#tpu.dimension_semantics<parallel>, #tpu.dimension_semantics<parallel>], iteration_bounds = array<i64: 2, 2>, scalar_prefetch = 0 : i64, scratch_operands = 0 : i64, tpu.core_type = #tpu.core_type<tc>, window_params = [{transform_indices = @transform_0, window_bounds = array<i64: 1, 64, 128>}, {pipeline_mode = #tpu.pipeline_mode<synchronous>, transform_indices = @transform_1, window_bounds = array<i64: 1, 128>}, {pipeline_mode = #tpu.pipeline_mode<synchronous>, transform_indices = @transform_2, window_bounds = array<i64: 1, 128>}, {pipeline_mode = #tpu.pipeline_mode<synchronous>, transform_indices = @transform_3, window_bounds = array<i64: 128, 128>}, {pipeline_mode = #tpu.pipeline_mode<synchronous>, transform_indices = @transform_4, window_bounds = array<i64: 128, 128>}, {transform_indices = @transform_5, window_bounds = array<i64: 1, 64, 2, 64>}, {transform_indices = @transform_6, window_bounds = array<i64: 1, 64, 2, 64>}]} {
    %c0 = arith.constant 0 : index
    %c0_0 = arith.constant 0 : index
    %c0_1 = arith.constant 0 : index
    %0 = vector.load %arg2[%c0, %c0_0, %c0_1] : memref<1x64x128xf32, #tpu.memory_space<vmem>>, vector<1x64x128xf32>
    %1 = vector.shape_cast %0 : vector<1x64x128xf32> to vector<64x128xf32>
    %c0_2 = arith.constant 0 : index
    %c0_3 = arith.constant 0 : index
    %2 = vector.load %arg3[%c0_2, %c0_3] : memref<1x128xf32, #tpu.memory_space<vmem>>, vector<1x128xf32>
    %c0_4 = arith.constant 0 : index
    %c0_5 = arith.constant 0 : index
    %3 = vector.load %arg4[%c0_4, %c0_5] : memref<1x128xf32, #tpu.memory_space<vmem>>, vector<1x128xf32>
    %cst = arith.constant dense<0.000000e+00> : vector<64xf32>
    %4 = vector.multi_reduction <add>, %1, %cst [1] : vector<64x128xf32> to vector<64xf32>
    %5 = vector.shape_cast %4 : vector<64xf32> to vector<64x1xf32>
    %cst_6 = arith.constant 1.280000e+02 : f32
    %6 = vector.broadcast %cst_6 : f32 to vector<64x1xf32>
    %7 = arith.divf %5, %6 : vector<64x1xf32>
    %8 = vector.broadcast %7 : vector<64x1xf32> to vector<64x128xf32>
    %9 = arith.subf %1, %8 : vector<64x128xf32>
    %10 = arith.mulf %9, %9 : vector<64x128xf32>
    %cst_7 = arith.constant dense<0.000000e+00> : vector<64xf32>
    %11 = vector.multi_reduction <add>, %10, %cst_7 [1] : vector<64x128xf32> to vector<64xf32>
    %12 = vector.shape_cast %11 : vector<64xf32> to vector<64x1xf32>
    %cst_8 = arith.constant 1.280000e+02 : f32
    %13 = vector.broadcast %cst_8 : f32 to vector<64x1xf32>
    %14 = arith.divf %12, %13 : vector<64x1xf32>
    %15 = vector.broadcast %7 : vector<64x1xf32> to vector<64x128xf32>
    %16 = arith.subf %1, %15 : vector<64x128xf32>
    %cst_9 = arith.constant 9.99999974E-6 : f32
    %17 = vector.broadcast %cst_9 : f32 to vector<64x1xf32>
    %18 = arith.addf %14, %17 : vector<64x1xf32>
    %19 = math.rsqrt %18 : vector<64x1xf32>
    %20 = vector.broadcast %19 : vector<64x1xf32> to vector<64x128xf32>
    %21 = arith.mulf %16, %20 : vector<64x128xf32>
    %22 = vector.broadcast %2 : vector<1x128xf32> to vector<64x128xf32>
    %23 = arith.mulf %21, %22 : vector<64x128xf32>
    %24 = vector.broadcast %3 : vector<1x128xf32> to vector<64x128xf32>
    %25 = arith.addf %23, %24 : vector<64x128xf32>
    %c0_10 = arith.constant 0 : index
    %c0_11 = arith.constant 0 : index
    %26 = vector.load %arg5[%c0_10, %c0_11] : memref<128x128xf32, #tpu.memory_space<vmem>>, vector<128x128xf32>
    %cst_12 = arith.constant dense<0.000000e+00> : vector<64x128xf32>
    %27 = tpu.matmul %25, %26, %cst_12 {dimension_numbers = #tpu.dot_dimension_numbers<[1], [0], [0], [1], [0, 0, 1, 1], [], []>} : vector<64x128xf32>, vector<128x128xf32>, vector<64x128xf32> -> vector<64x128xf32>
    %c0_13 = arith.constant 0 : index
    %c0_14 = arith.constant 0 : index
    %28 = vector.load %arg6[%c0_13, %c0_14] : memref<128x128xf32, #tpu.memory_space<vmem>>, vector<128x128xf32>
    %cst_15 = arith.constant dense<0.000000e+00> : vector<64x128xf32>
    %29 = tpu.matmul %25, %28, %cst_15 {dimension_numbers = #tpu.dot_dimension_numbers<[1], [0], [0], [1], [0, 0, 1, 1], [], []>} : vector<64x128xf32>, vector<128x128xf32>, vector<64x128xf32> -> vector<64x128xf32>
    %30 = vector.shape_cast %27 : vector<64x128xf32> to vector<64x2x64xf32>
    %c0_16 = arith.constant 0 : index
    %c0_17 = arith.constant 0 : index
    %c0_18 = arith.constant 0 : index
    %c0_19 = arith.constant 0 : index
    %31 = vector.load %arg7[%c0_16, %c0_17, %c0_18, %c0_19] : memref<1x64x2x64xf32, #tpu.memory_space<vmem>>, vector<1x64x2x64xf32>
    %32 = vector.shape_cast %31 : vector<1x64x2x64xf32> to vector<64x2x64xf32>
    %33 = vector.shape_cast %30 : vector<64x2x64xf32> to vector<1x64x2x64xf32>
    tpu.vector_store %arg7[%c0_16, %c0_17, %c0_18, %c0_19], %33 {strides = array<i32>} : memref<1x64x2x64xf32, #tpu.memory_space<vmem>>, vector<1x64x2x64xf32>,
    %34 = vector.shape_cast %29 : vector<64x128xf32> to vector<64x2x64xf32>
    %c0_20 = arith.constant 0 : index
    %c0_21 = arith.constant 0 : index
    %c0_22 = arith.constant 0 : index
    %c0_23 = arith.constant 0 : index
    %35 = vector.load %arg8[%c0_20, %c0_21, %c0_22, %c0_23] : memref<1x64x2x64xf32, #tpu.memory_space<vmem>>, vector<1x64x2x64xf32>
    %36 = vector.shape_cast %35 : vector<1x64x2x64xf32> to vector<64x2x64xf32>
    %37 = vector.shape_cast %34 : vector<64x2x64xf32> to vector<1x64x2x64xf32>
    tpu.vector_store %arg8[%c0_20, %c0_21, %c0_22, %c0_23], %37 {strides = array<i32>} : memref<1x64x2x64xf32, #tpu.memory_space<vmem>>, vector<1x64x2x64xf32>,
    return
  }
  func.func @transform_0(%arg0: i32, %arg1: i32) -> (i32, i32, i32) {
    %c0_i32 = arith.constant 0 : i32
    %c0_i32_0 = arith.constant 0 : i32
    return %arg0, %arg1, %c0_i32 : i32, i32, i32
  }
  func.func @transform_1(%arg0: i32, %arg1: i32) -> (i32, i32) {
    %c0_i32 = arith.constant 0 : i32
    %c0_i32_0 = arith.constant 0 : i32
    %c0_i32_1 = arith.constant 0 : i32
    return %c0_i32, %c0_i32_0 : i32, i32
  }
  func.func @transform_2(%arg0: i32, %arg1: i32) -> (i32, i32) {
    %c0_i32 = arith.constant 0 : i32
    %c0_i32_0 = arith.constant 0 : i32
    %c0_i32_1 = arith.constant 0 : i32
    return %c0_i32, %c0_i32_0 : i32, i32
  }
  func.func @transform_3(%arg0: i32, %arg1: i32) -> (i32, i32) {
    %c0_i32 = arith.constant 0 : i32
    %c0_i32_0 = arith.constant 0 : i32
    %c0_i32_1 = arith.constant 0 : i32
    return %c0_i32, %c0_i32_0 : i32, i32
  }
  func.func @transform_4(%arg0: i32, %arg1: i32) -> (i32, i32) {
    %c0_i32 = arith.constant 0 : i32
    %c0_i32_0 = arith.constant 0 : i32
    %c0_i32_1 = arith.constant 0 : i32
    return %c0_i32, %c0_i32_0 : i32, i32
  }
  func.func @transform_5(%arg0: i32, %arg1: i32) -> (i32, i32, i32, i32) {
    %c0_i32 = arith.constant 0 : i32
    %c0_i32_0 = arith.constant 0 : i32
    %c0_i32_1 = arith.constant 0 : i32
    return %arg0, %arg1, %c0_i32, %c0_i32_0 : i32, i32, i32, i32
  }
  func.func @transform_6(%arg0: i32, %arg1: i32) -> (i32, i32, i32, i32) {
    %c0_i32 = arith.constant 0 : i32
    %c0_i32_0 = arith.constant 0 : i32
    %c0_i32_1 = arith.constant 0 : i32
    return %arg0, %arg1, %c0_i32, %c0_i32_0 : i32, i32, i32, i32
  }
}

</mosaic_0001>

<llo_original>
// kernel: tpu_custom_call.1
$region0: #{tpu_custom_call.1}
  #allocation0 [shape = 'u32[]', space=smem, size = 0x4, offset = 0x4, fixed_abs, tag = 'smem constant byte address 0x4 - core index']
  #allocation1 [shape = 'u32[144,128]{1,0:T(1,128)}', space=vmem, size = 0x12000, scoped, tag = 'internal scratch']
  %s0 = inlined_call_operand.hbm [shape: f32[2,128,128], index: 0, kind: input, shape index: {}]
  %s1 = inlined_call_operand.vmem [shape: f32[1,128], index: 1, kind: input, shape index: {}]
  %s2 = inlined_call_operand.vmem [shape: f32[1,128], index: 2, kind: input, shape index: {}]
  %s3 = inlined_call_operand.hbm [shape: f32[128,128], index: 3, kind: input, shape index: {}]
  %s4 = inlined_call_operand.hbm [shape: f32[128,128], index: 4, kind: input, shape index: {}]
  %s5 = inlined_call_operand.vmem [shape: f32[2,128,2,64], index: 5, kind: output, shape index: {0}]
  %s6 = inlined_call_operand.vmem [shape: f32[2,128,2,64], index: 6, kind: output, shape index: {1}]
  %7 = xla_tuple %s5, %s6
  %s8 = sld [smem:[#allocation0]]
  $region73: #{tpu_custom_call.1} parent=0
    _
  %s10 = ssub.s32 1, %s8
  %s11 = scalar_select 0, %s10, %s8
  $region1: #{tpu_custom_call.1} parent=0
    #allocation2 [shape = 'u8[65536]{0}', space=vmem, size = 0x10000, scoped, tag = 'input window, operand 0']
    #allocation3 [shape = 's32[2]{0}', space=sflag, size = 0x8, scoped, tag = 'scoped memory for tpu_custom_call.1']
    #allocation4 [shape = 'u8[65536]{0}', space=vmem, size = 0x10000, scoped, tag = 'input window, operand 3, single buffered']
    #allocation5 [shape = 's32[1]{0}', space=sflag, size = 0x4, scoped, tag = 'scoped memory for tpu_custom_call.1']
    #allocation6 [shape = 'u8[65536]{0}', space=vmem, size = 0x10000, scoped, tag = 'input window, operand 4, single buffered']
    %12 = vsyncpa [#allocation3], 0
    %s13 = scalar_lea.sflag [#allocation3], 1
    %14 = vsyncpa %s13, 0
    %15 = vsyncpa [#allocation5], 0
    loop: start=0, step=1, limit=6
    $region2: #{tpu_custom_call.1} parent=1 // loop_pre_header
      _
    $region3: #{tpu_custom_call.1} parent=1 // loop_header
      %s17 = sphi 0, %s21
      %p18 = scmp.ge.s32.totalorder %s17, 6
      %s24 = sphi 0, %s36
      %s25 = sphi 0, %s32
      %s26 = sphi 0, %s24
      %s27 = sphi 0, %s25
      %s28 = sphi 0, %s26
      %s29 = sphi 0, %s27
      %s41 = sphi 0, %s43
      %s44 = sphi 0, %s41
      %s45 = sphi 0, %s44
      %s61 = sphi 0, %s45
      %s65 = sphi 0, %s65
      %s67 = sphi 0, %s65
      %s68 = sphi 0, %s67
      %s82 = sphi 0, %s68
      %s86 = sphi 0, %s86
      %s88 = sphi 0, %s86
      %s89 = sphi 0, %s88
      %s103 = sphi 0, %s89
      %s107 = sphi 0, %s107
      %s109 = sphi 0, %s107
      %s110 = sphi 0, %s109
      %s124 = sphi 0, %s110
      %s128 = sphi 0, %s128
      %s130 = sphi 0, %s128
      %s131 = sphi 0, %s130
      %s145 = sphi 0, %s131
      %s153 = sphi 0, %s155
      %s156 = sphi 0, %s153
      %s157 = sphi 0, %s156
      %s173 = sphi 0, %s157
      %s181 = sphi 0, %s183
      %s184 = sphi 0, %s181
      %s185 = sphi 0, %s184
      %s201 = sphi 0, %s185
    $region4: #{tpu_custom_call.1} parent=1 // loop_header_branch
      %20 = sbr.rel (%p18) target = $region8
    $region5: #{tpu_custom_call.1} parent=1 // loop_body
      %s22 = ssub.s32 %s17, 1
      %s23 = ssub.s32 %s17, 2
      %s30 = sadd.s32 1, %s25
      %p31 = scmp.ge.s32.totalorder %s30, 2
      %s32 = scalar_select %p31, 0, %s30
      %s33 = sadd.s32 1, %s24
      %s34 = scalar_select %p31, %s33, %s24
      %p35 = scmp.ge.s32.totalorder %s34, 2
      %s36 = scalar_select %p35, 0, %s34
      %s37 = ssub.s32 %s24, %s36
      %s38 = ssub.s32 %s25, %s32
      %s39 = sor.u32 %s37, %s38
      %p40 = scmp.eq.s32.totalorder %s39, 0
      %s42 = sadd.s32 %s41, 1
      %s43 = scalar_select %p40, %s41, %s42
      %p46 = pneg %p40
      %p47 = scmp.eq.s32.totalorder %s17, 3
      %p48 = por %p46, %p47
      %p49 = scmp.ne.s32.totalorder %s41, %s44
      %p50 = scmp.eq.s32.totalorder %s17, 0
      %p51 = por %p49, %p50
      %p52 = scmp.ne.s32.totalorder %s41, %s44
      %p53 = scmp.eq.s32.totalorder %s22, 3
      %p54 = por %p52, %p53
      %p55 = scmp.ne.s32.totalorder %s44, %s45
      %p56 = scmp.eq.s32.totalorder %s22, 0
      %p57 = por %p55, %p56
      %p58 = scmp.ne.s32.totalorder %s44, %s45
      %p59 = scmp.eq.s32.totalorder %s23, 3
      %p60 = por %p58, %p59
      %p62 = scmp.ne.s32.totalorder %s45, %s61
      %p63 = scmp.eq.s32.totalorder %s23, 0
      %p64 = por %p62, %p63
      %s66 = sadd.s32 %s65, 1
      %p69 = scmp.eq.s32.totalorder %s17, 3
      %p70 = scmp.ne.s32.totalorder %s65, %s67
      %p71 = scmp.eq.s32.totalorder %s17, 0
      %p72 = por %p70, %p71
      %p73 = scmp.ne.s32.totalorder %s65, %s67
      %p74 = scmp.eq.s32.totalorder %s22, 3
      %p75 = por %p73, %p74
      %p76 = scmp.ne.s32.totalorder %s67, %s68
      %p77 = scmp.eq.s32.totalorder %s22, 0
      %p78 = por %p76, %p77
      %p79 = scmp.ne.s32.totalorder %s67, %s68
      %p80 = scmp.eq.s32.totalorder %s23, 3
      %p81 = por %p79, %p80
      %p83 = scmp.ne.s32.totalorder %s68, %s82
      %p84 = scmp.eq.s32.totalorder %s23, 0
      %p85 = por %p83, %p84
      %s87 = sadd.s32 %s86, 1
      %p90 = scmp.eq.s32.totalorder %s17, 3
      %p91 = scmp.ne.s32.totalorder %s86, %s88
      %p92 = scmp.eq.s32.totalorder %s17, 0
      %p93 = por %p91, %p92
      %p94 = scmp.ne.s32.totalorder %s86, %s88
      %p95 = scmp.eq.s32.totalorder %s22, 3
      %p96 = por %p94, %p95
      %p97 = scmp.ne.s32.totalorder %s88, %s89
      %p98 = scmp.eq.s32.totalorder %s22, 0
      %p99 = por %p97, %p98
      %p100 = scmp.ne.s32.totalorder %s88, %s89
      %p101 = scmp.eq.s32.totalorder %s23, 3
      %p102 = por %p100, %p101
      %p104 = scmp.ne.s32.totalorder %s89, %s103
      %p105 = scmp.eq.s32.totalorder %s23, 0
      %p106 = por %p104, %p105
      %s108 = sadd.s32 %s107, 1
      %p111 = scmp.eq.s32.totalorder %s17, 3
      %p112 = scmp.ne.s32.totalorder %s107, %s109
      %p113 = scmp.eq.s32.totalorder %s17, 0
      %p114 = por %p112, %p113
      %p115 = scmp.ne.s32.totalorder %s107, %s109
      %p116 = scmp.eq.s32.totalorder %s22, 3
      %p117 = por %p115, %p116
      %p118 = scmp.ne.s32.totalorder %s109, %s110
      %p119 = scmp.eq.s32.totalorder %s22, 0
      %p120 = por %p118, %p119
      %p121 = scmp.ne.s32.totalorder %s109, %s110
      %p122 = scmp.eq.s32.totalorder %s23, 3
      %p123 = por %p121, %p122
      %p125 = scmp.ne.s32.totalorder %s110, %s124
      %p126 = scmp.eq.s32.totalorder %s23, 0
      %p127 = por %p125, %p126
      %s129 = sadd.s32 %s128, 1
      %p132 = scmp.eq.s32.totalorder %s17, 3
      %p133 = scmp.ne.s32.totalorder %s128, %s130
      %p134 = scmp.eq.s32.totalorder %s17, 0
      %p135 = por %p133, %p134
      %p136 = scmp.ne.s32.totalorder %s128, %s130
      %p137 = scmp.eq.s32.totalorder %s22, 3
      %p138 = por %p136, %p137
      %p139 = scmp.ne.s32.totalorder %s130, %s131
      %p140 = scmp.eq.s32.totalorder %s22, 0
      %p141 = por %p139, %p140
      %p142 = scmp.ne.s32.totalorder %s130, %s131
      %p143 = scmp.eq.s32.totalorder %s23, 3
      %p144 = por %p142, %p143
      %p146 = scmp.ne.s32.totalorder %s131, %s145
      %p147 = scmp.eq.s32.totalorder %s23, 0
      %p148 = por %p146, %p147
      %s149 = ssub.s32 %s24, %s36
      %s150 = ssub.s32 %s25, %s32
      %s151 = sor.u32 %s149, %s150
      %p152 = scmp.eq.s32.totalorder %s151, 0
      %s154 = sadd.s32 %s153, 1
      %s155 = scalar_select %p152, %s153, %s154
      %p158 = pneg %p152
      %p159 = scmp.eq.s32.totalorder %s17, 3
      %p160 = por %p158, %p159
      %p161 = scmp.ne.s32.totalorder %s153, %s156
      %p162 = scmp.eq.s32.totalorder %s17, 0
      %p163 = por %p161, %p162
      %p164 = scmp.ne.s32.totalorder %s153, %s156
      %p165 = scmp.eq.s32.totalorder %s22, 3
      %p166 = por %p164, %p165
      %p167 = scmp.ne.s32.totalorder %s156, %s157
      %p168 = scmp.eq.s32.totalorder %s22, 0
      %p169 = por %p167, %p168
      %p170 = scmp.ne.s32.totalorder %s156, %s157
      %p171 = scmp.eq.s32.totalorder %s23, 3
      %p172 = por %p170, %p171
      %p174 = scmp.ne.s32.totalorder %s157, %s173
      %p175 = scmp.eq.s32.totalorder %s23, 0
      %p176 = por %p174, %p175
      %s177 = ssub.s32 %s24, %s36
      %s178 = ssub.s32 %s25, %s32
      %s179 = sor.u32 %s177, %s178
      %p180 = scmp.eq.s32.totalorder %s179, 0
      %s182 = sadd.s32 %s181, 1
      %s183 = scalar_select %p180, %s181, %s182
      %p186 = pneg %p180
      %p187 = scmp.eq.s32.totalorder %s17, 3
      %p188 = por %p186, %p187
      %p189 = scmp.ne.s32.totalorder %s181, %s184
      %p190 = scmp.eq.s32.totalorder %s17, 0
      %p191 = por %p189, %p190
      %p192 = scmp.ne.s32.totalorder %s181, %s184
      %p193 = scmp.eq.s32.totalorder %s22, 3
      %p194 = por %p192, %p193
      %p195 = scmp.ne.s32.totalorder %s184, %s185
      %p196 = scmp.eq.s32.totalorder %s22, 0
      %p197 = por %p195, %p196
      %p198 = scmp.ne.s32.totalorder %s184, %s185
      %p199 = scmp.eq.s32.totalorder %s23, 3
      %p200 = por %p198, %p199
      %p202 = scmp.ne.s32.totalorder %s185, %s201
      %p203 = scmp.eq.s32.totalorder %s23, 0
      %p204 = por %p202, %p203
      %p205 = scmp.le.s32.totalorder 1, %s17
      %p206 = scmp.lt.s32.totalorder %s17, 5
      %p207 = pnand %p205, %p206
      %p208 = pneg %p207
      // Predicated region
      $region9: #{tpu_custom_call.1} parent=5 // pred_check
        _
      $region10: #{tpu_custom_call.1} parent=5 // pred_check_branch
        %210 = sbr.rel (%p207) target = $region12
      $region11: #{tpu_custom_call.1} parent=5 // pred_region
        %s211 = ssub.s32 %s17, 1
        // Predicated region
        $region13: #{tpu_custom_call.1} parent=11 // pred_check
          %p212 = pneg %p78
        $region14: #{tpu_custom_call.1} parent=11 // pred_check_branch
          %214 = sbr.rel (%p212) target = $region16
        $region15: #{tpu_custom_call.1} parent=11 // pred_region
          _
        $region16: #{tpu_custom_call.1} parent=11 // pred_fallthru
          _
        // Predicated region
        $region17: #{tpu_custom_call.1} parent=11 // pred_check
          %p215 = pneg %p99
        $region18: #{tpu_custom_call.1} parent=11 // pred_check_branch
          %217 = sbr.rel (%p215) target = $region20
        $region19: #{tpu_custom_call.1} parent=11 // pred_region
          _
        $region20: #{tpu_custom_call.1} parent=11 // pred_fallthru
          _
        // Predicated region
        $region21: #{tpu_custom_call.1} parent=11 // pred_check
          %p218 = pneg %p120
        $region22: #{tpu_custom_call.1} parent=11 // pred_check_branch
          %220 = sbr.rel (%p218) target = $region24
        $region23: #{tpu_custom_call.1} parent=11 // pred_region
          %s222 = ssub.s32 2048, 2048
          %223 = vsyncadd [#allocation5], %s222
          %s224 = sshll.u32 [#allocation4], 4
          %s225 = int_to_ptr.vmem [resolvable:$true] %s224
          %230 = dma.hbm_to_vmem [thread:$0]  %s3, 2048, %s225, [#allocation5], 128, 128, 8
        $region24: #{tpu_custom_call.1} parent=11 // pred_fallthru
          _
        // Predicated region
        $region25: #{tpu_custom_call.1} parent=11 // pred_check
          %p231 = pneg %p141
        $region26: #{tpu_custom_call.1} parent=11 // pred_check_branch
          %233 = sbr.rel (%p231) target = $region28
        $region27: #{tpu_custom_call.1} parent=11 // pred_region
          %s235 = ssub.s32 2048, 2048
          %236 = vsyncadd [#allocation5], %s235
          %s237 = sshll.u32 [#allocation6], 4
          %s238 = int_to_ptr.vmem [resolvable:$true] %s237
          %243 = dma.hbm_to_vmem [thread:$0]  %s4, 2048, %s238, [#allocation5], 128, 128, 8
        $region28: #{tpu_custom_call.1} parent=11 // pred_fallthru
          _
      $region12: #{tpu_custom_call.1} parent=5 // pred_fallthru
        _
      %p244 = scmp.lt.s32.totalorder %s17, 4
      // Predicated region
      $region29: #{tpu_custom_call.1} parent=5 // pred_check
        %p245 = pneg %p244
      $region30: #{tpu_custom_call.1} parent=5 // pred_check_branch
        %247 = sbr.rel (%p245) target = $region32
      $region31: #{tpu_custom_call.1} parent=5 // pred_region
        // Predicated region
        $region33: #{tpu_custom_call.1} parent=31 // pred_check
          %p248 = pneg %p51
        $region34: #{tpu_custom_call.1} parent=31 // pred_check_branch
          %250 = sbr.rel (%p248) target = $region36
        $region35: #{tpu_custom_call.1} parent=31 // pred_region
          %s251 = sand.u32 %s41, 1
          %s252 = scalar_lea.sflag [#allocation3], %s251
          %s253 = sand.u32 %s41, 1
          %s254 = smul.addr %s253, 64
          %s255 = scalar_lea.vmem [#allocation2], %s254
          %s256 = smul.u32 8, %s25
          %s258 = ssub.s32 1024, 1024
          %259 = vsyncadd %s252, %s258
          %s260 = smul.addr %s24, 16
          %s261 = sadd.s32 %s256, %s260
          %s262 = smul.addr %s261, 128
          %s263 = scalar_lea.hbm %s0, %s262
          %s264 = sshll.u32 %s255, 4
          %s265 = int_to_ptr.vmem [resolvable:$true] %s264
          %270 = dma.hbm_to_vmem [thread:$0]  %s263, 1024, %s265, %s252, 128, 128, 8
        $region36: #{tpu_custom_call.1} parent=31 // pred_fallthru
          _
      $region32: #{tpu_custom_call.1} parent=5 // pred_fallthru
        _
      %p271 = scmp.le.s32.totalorder 1, %s17
      %p272 = scmp.lt.s32.totalorder %s17, 5
      %p273 = pnand %p271, %p272
      %p274 = pneg %p273
      // Predicated region
      $region37: #{tpu_custom_call.1} parent=5 // pred_check
        _
      $region38: #{tpu_custom_call.1} parent=5 // pred_check_branch
        %276 = sbr.rel (%p273) target = $region40
      $region39: #{tpu_custom_call.1} parent=5 // pred_region
        %s277 = ssub.s32 %s17, 1
        %s278 = sand.u32 %s44, 1
        %s279 = scalar_lea.sflag [#allocation3], %s278
        %s280 = sand.u32 %s44, 1
        %s281 = smul.addr %s280, 64
        %s282 = scalar_lea.vmem [#allocation2], %s281
        // Predicated region
        $region41: #{tpu_custom_call.1} parent=39 // pred_check
          %p283 = pneg %p57
        $region42: #{tpu_custom_call.1} parent=39 // pred_check_branch
          %285 = sbr.rel (%p283) target = $region44
        $region43: #{tpu_custom_call.1} parent=39 // pred_region
          %286 = dma.done %s279, 1024
        $region44: #{tpu_custom_call.1} parent=39 // pred_fallthru
          _
        // Predicated region
        $region45: #{tpu_custom_call.1} parent=39 // pred_check
          %p287 = pneg %p120
        $region46: #{tpu_custom_call.1} parent=39 // pred_check_branch
          %289 = sbr.rel (%p287) target = $region48
        $region47: #{tpu_custom_call.1} parent=39 // pred_region
          %290 = dma.done [#allocation5], 2048
        $region48: #{tpu_custom_call.1} parent=39 // pred_fallthru
          _
        // Predicated region
        $region49: #{tpu_custom_call.1} parent=39 // pred_check
          %p291 = pneg %p141
        $region50: #{tpu_custom_call.1} parent=39 // pred_check_branch
          %293 = sbr.rel (%p291) target = $region52
        $region51: #{tpu_custom_call.1} parent=39 // pred_region
          %294 = dma.done [#allocation5], 2048
        $region52: #{tpu_custom_call.1} parent=39 // pred_fallthru
          _
        %s295 = sand.u32 %s44, 1
        %s296 = scalar_lea.sflag [#allocation3], %s295
        %s297 = sand.u32 %s44, 1
        %s298 = smul.addr %s297, 64
        %s299 = scalar_lea.vmem [#allocation2], %s298
        %p300 = pneg %p57
        %p301 = pneg %p54
        %p302 = pneg %p78
        %p303 = pneg %p75
        %p304 = pneg %p99
        %p305 = pneg %p96
        %p306 = pneg %p120
        %p307 = pneg %p117
        %p308 = pneg %p141
        %p309 = pneg %p138
        %p310 = pneg %p169
        %p311 = pneg %p166
        %s312 = smul.u32 64, %s27
        %p313 = scmp.lt.s32.totalorder %s26, 1
        %s314 = scalar_select %p313, %s26, 1
        %p315 = scmp.lt.s32.totalorder %s312, 127
        %s316 = scalar_select %p315, %s312, 127
        %s317 = smul.addr %s314, 128
        %s318 = sadd.s32 %s316, %s317
        %s319 = smul.addr %s318, 2
        %s320 = scalar_lea.vmem %s5, %s319
        %p321 = pneg %p197
        %p322 = pneg %p194
        %s323 = smul.u32 64, %s27
        %p324 = scmp.lt.s32.totalorder %s26, 1
        %s325 = scalar_select %p324, %s26, 1
        %p326 = scmp.lt.s32.totalorder %s323, 127
        %s327 = scalar_select %p326, %s323, 127
        %s328 = smul.addr %s325, 128
        %s329 = sadd.s32 %s327, %s328
        %s330 = smul.addr %s329, 2
        %s331 = scalar_lea.vmem %s6, %s330
        %s332 = smul.u32 8, %s27
        %s333 = smul.u32 64, %s27
        %p334 = scmp.lt.s32.totalorder %s26, 1
        %s335 = scalar_select %p334, %s26, 1
        %p336 = scmp.lt.s32.totalorder %s333, 127
        %s337 = scalar_select %p336, %s333, 127
        %s338 = smul.addr %s335, 128
        %s339 = sadd.s32 %s337, %s338
        %s340 = smul.addr %s339, 2
        %s341 = scalar_lea.vmem %s5, %s340
        %s342 = smul.u32 64, %s27
        %s343 = smul.u32 64, %s27
        %p344 = scmp.lt.s32.totalorder %s26, 1
        %s345 = scalar_select %p344, %s26, 1
        %p346 = scmp.lt.s32.totalorder %s343, 127
        %s347 = scalar_select %p346, %s343, 127
        %s348 = smul.addr %s345, 128
        %s349 = sadd.s32 %s347, %s348
        %s350 = smul.addr %s349, 2
        %s351 = scalar_lea.vmem %s6, %s350
        %s352 = smul.u32 64, %s27
        %v353 = vld [vmem:[%s282] sm:$0xff]
        %v354 = vld [vmem:[%s282 + $0x8] sm:$0xff]
        %v355 = vld [vmem:[%s282 + $0x10] sm:$0xff]
        %v356 = vld [vmem:[%s282 + $0x18] sm:$0xff]
        %v357 = vld [vmem:[%s282 + $0x20] sm:$0xff]
        %v358 = vld [vmem:[%s282 + $0x28] sm:$0xff]
        %v359 = vld [vmem:[%s282 + $0x30] sm:$0xff]
        %v360 = vld [vmem:[%s282 + $0x38] sm:$0xff]
        %v361 = vld [vmem:[%s1] sm:$0x1]
        %v362 = vld [vmem:[%s2] sm:$0x1]
        %363 = vadd.xlane.f32.xlu0 %v353
        %v364 = vpop.xlane.xlu0 %363
        %365 = vadd.xlane.f32.xlu0 %v354
        %v366 = vpop.xlane.xlu0 %365
        %367 = vadd.xlane.f32.xlu0 %v355
        %v368 = vpop.xlane.xlu0 %367
        %369 = vadd.xlane.f32.xlu0 %v356
        %v370 = vpop.xlane.xlu0 %369
        %371 = vadd.xlane.f32.xlu0 %v357
        %v372 = vpop.xlane.xlu0 %371
        %373 = vadd.xlane.f32.xlu0 %v358
        %v374 = vpop.xlane.xlu0 %373
        %375 = vadd.xlane.f32.xlu0 %v359
        %v376 = vpop.xlane.xlu0 %375
        %377 = vadd.xlane.f32.xlu0 %v360
        %v378 = vpop.xlane.xlu0 %377
        %v379 = vrcp.pop 128.0
        %v380 = vmul.f32 %v364, %v379
        %v381 = vmul.f32 %v366, %v379
        %v382 = vmul.f32 %v368, %v379
        %v383 = vmul.f32 %v370, %v379
        %v384 = vmul.f32 %v372, %v379
        %v385 = vmul.f32 %v374, %v379
        %v386 = vmul.f32 %v376, %v379
        %v387 = vmul.f32 %v378, %v379
        %v388 = vsub.f32 %v353, %v380
        %v389 = vsub.f32 %v354, %v381
        %v390 = vsub.f32 %v355, %v382
        %v391 = vsub.f32 %v356, %v383
        %v392 = vsub.f32 %v357, %v384
        %v393 = vsub.f32 %v358, %v385
        %v394 = vsub.f32 %v359, %v386
        %v395 = vsub.f32 %v360, %v387
        %v396 = vmul.f32 %v388, %v388
        %v397 = vmul.f32 %v389, %v389
        %v398 = vmul.f32 %v390, %v390
        %v399 = vmul.f32 %v391, %v391
        %v400 = vmul.f32 %v392, %v392
        %v401 = vmul.f32 %v393, %v393
        %v402 = vmul.f32 %v394, %v394
        %v403 = vmul.f32 %v395, %v395
        %404 = vadd.xlane.f32.xlu0 %v396
        %v405 = vpop.xlane.xlu0 %404
        %406 = vadd.xlane.f32.xlu0 %v397
        %v407 = vpop.xlane.xlu0 %406
        %408 = vadd.xlane.f32.xlu0 %v398
        %v409 = vpop.xlane.xlu0 %408
        %410 = vadd.xlane.f32.xlu0 %v399
        %v411 = vpop.xlane.xlu0 %410
        %412 = vadd.xlane.f32.xlu0 %v400
        %v413 = vpop.xlane.xlu0 %412
        %414 = vadd.xlane.f32.xlu0 %v401
        %v415 = vpop.xlane.xlu0 %414
        %416 = vadd.xlane.f32.xlu0 %v402
        %v417 = vpop.xlane.xlu0 %416
        %418 = vadd.xlane.f32.xlu0 %v403
        %v419 = vpop.xlane.xlu0 %418
        %v420 = vmul.f32 %v405, %v379
        %v421 = vmul.f32 %v407, %v379
        %v422 = vmul.f32 %v409, %v379
        %v423 = vmul.f32 %v411, %v379
        %v424 = vmul.f32 %v413, %v379
        %v425 = vmul.f32 %v415, %v379
        %v426 = vmul.f32 %v417, %v379
        %v427 = vmul.f32 %v419, %v379
        %v428 = vadd.f32 %v420, 1e-05
        %v429 = vadd.f32 %v421, 1e-05
        %v430 = vadd.f32 %v422, 1e-05
        %v431 = vadd.f32 %v423, 1e-05
        %v432 = vadd.f32 %v424, 1e-05
        %v433 = vadd.f32 %v425, 1e-05
        %v434 = vadd.f32 %v426, 1e-05
        %v435 = vadd.f32 %v427, 1e-05
        %v436 = vrsqrt.pop %v428
        %v437 = vrsqrt.pop %v429
        %v438 = vrsqrt.pop %v430
        %v439 = vrsqrt.pop %v431
        %v440 = vrsqrt.pop %v432
        %v441 = vrsqrt.pop %v433
        %v442 = vrsqrt.pop %v434
        %v443 = vrsqrt.pop %v435
        %v444 = vmul.f32 %v388, %v436
        %v445 = vmul.f32 %v389, %v437
        %v446 = vmul.f32 %v390, %v438
        %v447 = vmul.f32 %v391, %v439
        %v448 = vmul.f32 %v392, %v440
        %v449 = vmul.f32 %v393, %v441
        %v450 = vmul.f32 %v394, %v442
        %v451 = vmul.f32 %v395, %v443
        %v453 = vlaneseq
        %v454 = vshrl.u32 %v453, 7
        %v455 = vsub.s32 0, %v454
        %v456 = vrot.slane %v361, %v455
        %v458 = vmul.f32 %v444, %v456
        %v459 = vmul.f32 %v445, %v456
        %v460 = vmul.f32 %v446, %v456
        %v461 = vmul.f32 %v447, %v456
        %v462 = vmul.f32 %v448, %v456
        %v463 = vmul.f32 %v449, %v456
        %v464 = vmul.f32 %v450, %v456
        %v465 = vmul.f32 %v451, %v456
        %v467 = vlaneseq
        %v468 = vshrl.u32 %v467, 7
        %v469 = vsub.s32 0, %v468
        %v470 = vrot.slane %v362, %v469
        %v472 = vadd.f32 %v458, %v470
        %v473 = vadd.f32 %v459, %v470
        %v474 = vadd.f32 %v460, %v470
        %v475 = vadd.f32 %v461, %v470
        %v476 = vadd.f32 %v462, %v470
        %v477 = vadd.f32 %v463, %v470
        %v478 = vadd.f32 %v464, %v470
        %v479 = vadd.f32 %v465, %v470
        %v480 = vld [vmem:[#allocation4] sm:$0xff]
        %v481 = vld [vmem:[#allocation4 + $0x8] sm:$0xff]
        %v482 = vld [vmem:[#allocation4 + $0x10] sm:$0xff]
        %v483 = vld [vmem:[#allocation4 + $0x18] sm:$0xff]
        %v484 = vld [vmem:[#allocation4 + $0x20] sm:$0xff]
        %v485 = vld [vmem:[#allocation4 + $0x28] sm:$0xff]
        %v486 = vld [vmem:[#allocation4 + $0x30] sm:$0xff]
        %v487 = vld [vmem:[#allocation4 + $0x38] sm:$0xff]
        %v488 = vld [vmem:[#allocation4 + $0x40] sm:$0xff]
        %v489 = vld [vmem:[#allocation4 + $0x48] sm:$0xff]
        %v490 = vld [vmem:[#allocation4 + $0x50] sm:$0xff]
        %v491 = vld [vmem:[#allocation4 + $0x58] sm:$0xff]
        %v492 = vld [vmem:[#allocation4 + $0x60] sm:$0xff]
        %v493 = vld [vmem:[#allocation4 + $0x68] sm:$0xff]
        %v494 = vld [vmem:[#allocation4 + $0x70] sm:$0xff]
        %v495 = vld [vmem:[#allocation4 + $0x78] sm:$0xff]
        %496 = vmatprep.subr.mxu0 0.0
        %497 = vmatpush1.msra.mxu0 %v480
        %498 = vmatprep.subr.mxu0 0.0
        %499 = vmatpush1.msra.mxu0 %v481
        %500 = vmatprep.subr.mxu0 0.0
        %501 = vmatpush1.msra.mxu0 %v482
        %502 = vmatprep.subr.mxu0 0.0
        %503 = vmatpush1.msra.mxu0 %v483
        %504 = vmatprep.subr.mxu0 0.0
        %505 = vmatpush1.msra.mxu0 %v484
        %506 = vmatprep.subr.mxu0 0.0
        %507 = vmatpush1.msra.mxu0 %v485
        %508 = vmatprep.subr.mxu0 0.0
        %509 = vmatpush1.msra.mxu0 %v486
        %510 = vmatprep.subr.mxu0 0.0
        %511 = vmatpush1.msra.mxu0 %v487
        %512 = vmatprep.subr.mxu0 0.0
        %513 = vmatpush1.msra.mxu0 %v488
        %514 = vmatprep.subr.mxu0 0.0
        %515 = vmatpush1.msra.mxu0 %v489
        %516 = vmatprep.subr.mxu0 0.0
        %517 = vmatpush1.msra.mxu0 %v490
        %518 = vmatprep.subr.mxu0 0.0
        %519 = vmatpush1.msra.mxu0 %v491
        %520 = vmatprep.subr.mxu0 0.0
        %521 = vmatpush1.msra.mxu0 %v492
        %522 = vmatprep.subr.mxu0 0.0
        %523 = vmatpush1.msra.mxu0 %v493
        %524 = vmatprep.subr.mxu0 0.0
        %525 = vmatpush1.msra.mxu0 %v494
        %526 = vmatprep.subr.mxu0 0.0
        %527 = vmatpush1.msra.mxu0 %v495
        %528 = vmatprep.subr.mxu0 0.0
        %529 = vmatpush1.msra.mxu0 0.0
        %530 = vmatprep.subr.mxu0 0.0
        %531 = vmatpush1.msra.mxu0 0.0
        %532 = vmatprep.subr.mxu0 0.0
        %533 = vmatpush1.msra.mxu0 0.0
        %534 = vmatprep.subr.mxu0 0.0
        %535 = vmatpush1.msra.mxu0 0.0
        %536 = vmatprep.subr.mxu0 0.0
        %537 = vmatpush1.msra.mxu0 0.0
        %538 = vmatprep.subr.mxu0 0.0
        %539 = vmatpush1.msra.mxu0 0.0
        %540 = vmatprep.subr.mxu0 0.0
        %541 = vmatpush1.msra.mxu0 0.0
        %542 = vmatprep.subr.mxu0 0.0
        %543 = vmatpush1.msra.mxu0 0.0
        %544 = vmatprep.subr.mxu0 0.0
        %545 = vmatpush1.msra.mxu0 0.0
        %546 = vmatprep.subr.mxu0 0.0
        %547 = vmatpush1.msra.mxu0 0.0
        %548 = vmatprep.subr.mxu0 0.0
        %549 = vmatpush1.msra.mxu0 0.0
        %550 = vmatprep.subr.mxu0 0.0
        %551 = vmatpush1.msra.mxu0 0.0
        %552 = vmatprep.subr.mxu0 0.0
        %553 = vmatpush1.msra.mxu0 0.0
        %554 = vmatprep.subr.mxu0 0.0
        %555 = vmatpush1.msra.mxu0 0.0
        %556 = vmatprep.subr.mxu0 0.0
        %557 = vmatpush1.msra.mxu0 0.0
        %558 = vmatprep.subr.mxu0 0.0
        %559 = vmatpush1.msra.mxu0 0.0
        %560 = vmatprep.mubr.f32.mxu0 0.0
        %561 = vmatmul.mubr.f32.gmra.mrb[0].mxu0 %v472
        %v562 = vpop.f32.mrb[0].mxu0
        %v563 = vadd.f32 0.0, %v562
        %v564 = vpop.f32.mrb[0].mxu0
        %565 = vmatprep.mubr.f32.mxu0 0.0
        %566 = vmatmul.mubr.f32.gmra.mrb[0].mxu0 %v473
        %v567 = vpop.f32.mrb[0].mxu0
        %v568 = vadd.f32 0.0, %v567
        %v569 = vpop.f32.mrb[0].mxu0
        %570 = vmatprep.mubr.f32.mxu0 0.0
        %571 = vmatmul.mubr.f32.gmra.mrb[0].mxu0 %v474
        %v572 = vpop.f32.mrb[0].mxu0
        %v573 = vadd.f32 0.0, %v572
        %v574 = vpop.f32.mrb[0].mxu0
        %575 = vmatprep.mubr.f32.mxu0 0.0
        %576 = vmatmul.mubr.f32.gmra.mrb[0].mxu0 %v475
        %v577 = vpop.f32.mrb[0].mxu0
        %v578 = vadd.f32 0.0, %v577
        %v579 = vpop.f32.mrb[0].mxu0
        %580 = vmatprep.mubr.f32.mxu0 0.0
        %581 = vmatmul.mubr.f32.gmra.mrb[0].mxu0 %v476
        %v582 = vpop.f32.mrb[0].mxu0
        %v583 = vadd.f32 0.0, %v582
        %v584 = vpop.f32.mrb[0].mxu0
        %585 = vmatprep.mubr.f32.mxu0 0.0
        %586 = vmatmul.mubr.f32.gmra.mrb[0].mxu0 %v477
        %v587 = vpop.f32.mrb[0].mxu0
        %v588 = vadd.f32 0.0, %v587
        %v589 = vpop.f32.mrb[0].mxu0
        %590 = vmatprep.mubr.f32.mxu0 0.0
        %591 = vmatmul.mubr.f32.gmra.mrb[0].mxu0 %v478
        %v592 = vpop.f32.mrb[0].mxu0
        %v593 = vadd.f32 0.0, %v592
        %v594 = vpop.f32.mrb[0].mxu0
        %595 = vmatprep.mubr.f32.mxu0 0.0
        %596 = vmatmul.mubr.f32.gmra.mrb[0].mxu0 %v479
        %v597 = vpop.f32.mrb[0].mxu0
        %v598 = vadd.f32 0.0, %v597
        %v599 = vpop.f32.mrb[0].mxu0
        %600 = vdwg.mxu0
        %v601 = vld [vmem:[#allocation6] sm:$0xff]
        %v602 = vld [vmem:[#allocation6 + $0x8] sm:$0xff]
        %v603 = vld [vmem:[#allocation6 + $0x10] sm:$0xff]
        %v604 = vld [vmem:[#allocation6 + $0x18] sm:$0xff]
        %v605 = vld [vmem:[#allocation6 + $0x20] sm:$0xff]
        %v606 = vld [vmem:[#allocation6 + $0x28] sm:$0xff]
        %v607 = vld [vmem:[#allocation6 + $0x30] sm:$0xff]
        %v608 = vld [vmem:[#allocation6 + $0x38] sm:$0xff]
        %v609 = vld [vmem:[#allocation6 + $0x40] sm:$0xff]
        %v610 = vld [vmem:[#allocation6 + $0x48] sm:$0xff]
        %v611 = vld [vmem:[#allocation6 + $0x50] sm:$0xff]
        %v612 = vld [vmem:[#allocation6 + $0x58] sm:$0xff]
        %v613 = vld [vmem:[#allocation6 + $0x60] sm:$0xff]
        %v614 = vld [vmem:[#allocation6 + $0x68] sm:$0xff]
        %v615 = vld [vmem:[#allocation6 + $0x70] sm:$0xff]
        %v616 = vld [vmem:[#allocation6 + $0x78] sm:$0xff]
        %617 = vmatprep.subr.mxu0 0.0
        %618 = vmatpush1.msra.mxu0 %v601
        %619 = vmatprep.subr.mxu0 0.0
        %620 = vmatpush1.msra.mxu0 %v602
        %621 = vmatprep.subr.mxu0 0.0
        %622 = vmatpush1.msra.mxu0 %v603
        %623 = vmatprep.subr.mxu0 0.0
        %624 = vmatpush1.msra.mxu0 %v604
        %625 = vmatprep.subr.mxu0 0.0
        %626 = vmatpush1.msra.mxu0 %v605
        %627 = vmatprep.subr.mxu0 0.0
        %628 = vmatpush1.msra.mxu0 %v606
        %629 = vmatprep.subr.mxu0 0.0
        %630 = vmatpush1.msra.mxu0 %v607
        %631 = vmatprep.subr.mxu0 0.0
        %632 = vmatpush1.msra.mxu0 %v608
        %633 = vmatprep.subr.mxu0 0.0
        %634 = vmatpush1.msra.mxu0 %v609
        %635 = vmatprep.subr.mxu0 0.0
        %636 = vmatpush1.msra.mxu0 %v610
        %637 = vmatprep.subr.mxu0 0.0
        %638 = vmatpush1.msra.mxu0 %v611
        %639 = vmatprep.subr.mxu0 0.0
        %640 = vmatpush1.msra.mxu0 %v612
        %641 = vmatprep.subr.mxu0 0.0
        %642 = vmatpush1.msra.mxu0 %v613
        %643 = vmatprep.subr.mxu0 0.0
        %644 = vmatpush1.msra.mxu0 %v614
        %645 = vmatprep.subr.mxu0 0.0
        %646 = vmatpush1.msra.mxu0 %v615
        %647 = vmatprep.subr.mxu0 0.0
        %648 = vmatpush1.msra.mxu0 %v616
        %649 = vmatprep.subr.mxu0 0.0
        %650 = vmatpush1.msra.mxu0 0.0
        %651 = vmatprep.subr.mxu0 0.0
        %652 = vmatpush1.msra.mxu0 0.0
        %653 = vmatprep.subr.mxu0 0.0
        %654 = vmatpush1.msra.mxu0 0.0
        %655 = vmatprep.subr.mxu0 0.0
        %656 = vmatpush1.msra.mxu0 0.0
        %657 = vmatprep.subr.mxu0 0.0
        %658 = vmatpush1.msra.mxu0 0.0
        %659 = vmatprep.subr.mxu0 0.0
        %660 = vmatpush1.msra.mxu0 0.0
        %661 = vmatprep.subr.mxu0 0.0
        %662 = vmatpush1.msra.mxu0 0.0
        %663 = vmatprep.subr.mxu0 0.0
        %664 = vmatpush1.msra.mxu0 0.0
        %665 = vmatprep.subr.mxu0 0.0
        %666 = vmatpush1.msra.mxu0 0.0
        %667 = vmatprep.subr.mxu0 0.0
        %668 = vmatpush1.msra.mxu0 0.0
        %669 = vmatprep.subr.mxu0 0.0
        %670 = vmatpush1.msra.mxu0 0.0
        %671 = vmatprep.subr.mxu0 0.0
        %672 = vmatpush1.msra.mxu0 0.0
        %673 = vmatprep.subr.mxu0 0.0
        %674 = vmatpush1.msra.mxu0 0.0
        %675 = vmatprep.subr.mxu0 0.0
        %676 = vmatpush1.msra.mxu0 0.0
        %677 = vmatprep.subr.mxu0 0.0
        %678 = vmatpush1.msra.mxu0 0.0
        %679 = vmatprep.subr.mxu0 0.0
        %680 = vmatpush1.msra.mxu0 0.0
        %681 = vmatprep.mubr.f32.mxu0 0.0
        %682 = vmatmul.mubr.f32.gmra.mrb[0].mxu0 %v472
        %v683 = vpop.f32.mrb[0].mxu0
        %v684 = vadd.f32 0.0, %v683
        %v685 = vpop.f32.mrb[0].mxu0
        %686 = vmatprep.mubr.f32.mxu0 0.0
        %687 = vmatmul.mubr.f32.gmra.mrb[0].mxu0 %v473
        %v688 = vpop.f32.mrb[0].mxu0
        %v689 = vadd.f32 0.0, %v688
        %v690 = vpop.f32.mrb[0].mxu0
        %691 = vmatprep.mubr.f32.mxu0 0.0
        %692 = vmatmul.mubr.f32.gmra.mrb[0].mxu0 %v474
        %v693 = vpop.f32.mrb[0].mxu0
        %v694 = vadd.f32 0.0, %v693
        %v695 = vpop.f32.mrb[0].mxu0
        %696 = vmatprep.mubr.f32.mxu0 0.0
        %697 = vmatmul.mubr.f32.gmra.mrb[0].mxu0 %v475
        %v698 = vpop.f32.mrb[0].mxu0
        %v699 = vadd.f32 0.0, %v698
        %v700 = vpop.f32.mrb[0].mxu0
        %701 = vmatprep.mubr.f32.mxu0 0.0
        %702 = vmatmul.mubr.f32.gmra.mrb[0].mxu0 %v476
        %v703 = vpop.f32.mrb[0].mxu0
        %v704 = vadd.f32 0.0, %v703
        %v705 = vpop.f32.mrb[0].mxu0
        %706 = vmatprep.mubr.f32.mxu0 0.0
        %707 = vmatmul.mubr.f32.gmra.mrb[0].mxu0 %v477
        %v708 = vpop.f32.mrb[0].mxu0
        %v709 = vadd.f32 0.0, %v708
        %v710 = vpop.f32.mrb[0].mxu0
        %711 = vmatprep.mubr.f32.mxu0 0.0
        %712 = vmatmul.mubr.f32.gmra.mrb[0].mxu0 %v478
        %v713 = vpop.f32.mrb[0].mxu0
        %v714 = vadd.f32 0.0, %v713
        %v715 = vpop.f32.mrb[0].mxu0
        %716 = vmatprep.mubr.f32.mxu0 0.0
        %717 = vmatmul.mubr.f32.gmra.mrb[0].mxu0 %v479
        %v718 = vpop.f32.mrb[0].mxu0
        %v719 = vadd.f32 0.0, %v718
        %v720 = vpop.f32.mrb[0].mxu0
        %721 = vdwg.mxu0
        %730 = vrot.lane.b32.xlu0 %v563, 64
        %v731 = vpop.permute.xlu0 %730
        %732 = vrot.lane.b32.xlu0 %v568, 64
        %v733 = vpop.permute.xlu0 %732
        %734 = vrot.lane.b32.xlu0 %v573, 64
        %v735 = vpop.permute.xlu0 %734
        %736 = vrot.lane.b32.xlu0 %v578, 64
        %v737 = vpop.permute.xlu0 %736
        %738 = vrot.lane.b32.xlu0 %v583, 64
        %v739 = vpop.permute.xlu0 %738
        %740 = vrot.lane.b32.xlu0 %v588, 64
        %v741 = vpop.permute.xlu0 %740
        %742 = vrot.lane.b32.xlu0 %v593, 64
        %v743 = vpop.permute.xlu0 %742
        %744 = vrot.lane.b32.xlu0 %v598, 64
        %v745 = vpop.permute.xlu0 %744
        %v754 = vcombine.high %v563, 0.0
        %v756 = vunpack.c.l.s4 1983009808
        %v757 = vunpack.c.0.s8 %v756
        %v758 = vlaneseq
        %v759 = vshrl.u32 %v758, 7
        %v760 = vsub.s32 %v757, %v759
        %v761 = vrot.slane %v563, %v760
        %v763 = vunpack.c.l.s4 1983009808
        %v764 = vunpack.c.0.s8 %v763
        %v765 = vlaneseq
        %v766 = vshrl.u32 %v765, 7
        %v767 = vsub.s32 %v764, %v766
        %v768 = vrot.slane %v754, %v767
        %v769 = vcombine.high %v731, 0.0
        %v771 = vunpack.c.l.s4 1983009808
        %v772 = vunpack.c.0.s8 %v771
        %v773 = vlaneseq
        %v774 = vshrl.u32 %v773, 7
        %v775 = vsub.s32 %v772, %v774
        %v776 = vrot.slane %v731, %v775
        %v778 = vunpack.c.l.s4 1983009808
        %v779 = vunpack.c.0.s8 %v778
        %v780 = vlaneseq
        %v781 = vshrl.u32 %v780, 7
        %v782 = vsub.s32 %v779, %v781
        %v783 = vrot.slane %v769, %v782
        %v784 = vcombine.low %v761, %v776
        %v785 = vcombine.high %v761, %v776
        %v787 = vunpack.c.l.s4 1934713408
        %v788 = vunpack.c.0.s8 %v787
        %v789 = vlaneseq
        %v790 = vshrl.u32 %v789, 7
        %v791 = vsub.s32 %v788, %v790
        %v792 = vrot.slane %v784, %v791
        %v794 = vunpack.c.l.s4 1934713408
        %v795 = vunpack.c.0.s8 %v794
        %v796 = vlaneseq
        %v797 = vshrl.u32 %v796, 7
        %v798 = vsub.s32 %v795, %v797
        %v799 = vrot.slane %v785, %v798
        %v800 = vcombine.low %v768, %v783
        %v801 = vcombine.high %v768, %v783
        %v803 = vunpack.c.l.s4 1934713408
        %v804 = vunpack.c.0.s8 %v803
        %v805 = vlaneseq
        %v806 = vshrl.u32 %v805, 7
        %v807 = vsub.s32 %v804, %v806
        %v808 = vrot.slane %v800, %v807
        %v810 = vunpack.c.l.s4 1934713408
        %v811 = vunpack.c.0.s8 %v810
        %v812 = vlaneseq
        %v813 = vshrl.u32 %v812, 7
        %v814 = vsub.s32 %v811, %v813
        %v815 = vrot.slane %v801, %v814
        %v816 = vcombine.high %v792, 0.0
        %v817 = vcombine.high %v799, 0.0
        %v818 = vcombine.high %v808, 0.0
        %v819 = vcombine.high %v815, 0.0
        %v820 = vcombine.high %v568, 0.0
        %v822 = vunpack.c.l.s4 1983009808
        %v823 = vunpack.c.0.s8 %v822
        %v824 = vlaneseq
        %v825 = vshrl.u32 %v824, 7
        %v826 = vsub.s32 %v823, %v825
        %v827 = vrot.slane %v568, %v826
        %v829 = vunpack.c.l.s4 1983009808
        %v830 = vunpack.c.0.s8 %v829
        %v831 = vlaneseq
        %v832 = vshrl.u32 %v831, 7
        %v833 = vsub.s32 %v830, %v832
        %v834 = vrot.slane %v820, %v833
        %v835 = vcombine.high %v733, 0.0
        %v837 = vunpack.c.l.s4 1983009808
        %v838 = vunpack.c.0.s8 %v837
        %v839 = vlaneseq
        %v840 = vshrl.u32 %v839, 7
        %v841 = vsub.s32 %v838, %v840
        %v842 = vrot.slane %v733, %v841
        %v844 = vunpack.c.l.s4 1983009808
        %v845 = vunpack.c.0.s8 %v844
        %v846 = vlaneseq
        %v847 = vshrl.u32 %v846, 7
        %v848 = vsub.s32 %v845, %v847
        %v849 = vrot.slane %v835, %v848
        %v850 = vcombine.low %v827, %v842
        %v851 = vcombine.high %v827, %v842
        %v853 = vunpack.c.l.s4 1934713408
        %v854 = vunpack.c.0.s8 %v853
        %v855 = vlaneseq
        %v856 = vshrl.u32 %v855, 7
        %v857 = vsub.s32 %v854, %v856
        %v858 = vrot.slane %v850, %v857
        %v860 = vunpack.c.l.s4 1934713408
        %v861 = vunpack.c.0.s8 %v860
        %v862 = vlaneseq
        %v863 = vshrl.u32 %v862, 7
        %v864 = vsub.s32 %v861, %v863
        %v865 = vrot.slane %v851, %v864
        %v866 = vcombine.low %v834, %v849
        %v867 = vcombine.high %v834, %v849
        %v869 = vunpack.c.l.s4 1934713408
        %v870 = vunpack.c.0.s8 %v869
        %v871 = vlaneseq
        %v872 = vshrl.u32 %v871, 7
        %v873 = vsub.s32 %v870, %v872
        %v874 = vrot.slane %v866, %v873
        %v876 = vunpack.c.l.s4 1934713408
        %v877 = vunpack.c.0.s8 %v876
        %v878 = vlaneseq
        %v879 = vshrl.u32 %v878, 7
        %v880 = vsub.s32 %v877, %v879
        %v881 = vrot.slane %v867, %v880
        %v882 = vcombine.high %v858, 0.0
        %v883 = vcombine.high %v865, 0.0
        %v884 = vcombine.high %v874, 0.0
        %v885 = vcombine.high %v881, 0.0
        %v886 = vcombine.high %v573, 0.0
        %v888 = vunpack.c.l.s4 1983009808
        %v889 = vunpack.c.0.s8 %v888
        %v890 = vlaneseq
        %v891 = vshrl.u32 %v890, 7
        %v892 = vsub.s32 %v889, %v891
        %v893 = vrot.slane %v573, %v892
        %v895 = vunpack.c.l.s4 1983009808
        %v896 = vunpack.c.0.s8 %v895
        %v897 = vlaneseq
        %v898 = vshrl.u32 %v897, 7
        %v899 = vsub.s32 %v896, %v898
        %v900 = vrot.slane %v886, %v899
        %v901 = vcombine.high %v735, 0.0
        %v903 = vunpack.c.l.s4 1983009808
        %v904 = vunpack.c.0.s8 %v903
        %v905 = vlaneseq
        %v906 = vshrl.u32 %v905, 7
        %v907 = vsub.s32 %v904, %v906
        %v908 = vrot.slane %v735, %v907
        %v910 = vunpack.c.l.s4 1983009808
        %v911 = vunpack.c.0.s8 %v910
        %v912 = vlaneseq
        %v913 = vshrl.u32 %v912, 7
        %v914 = vsub.s32 %v911, %v913
        %v915 = vrot.slane %v901, %v914
        %v916 = vcombine.low %v893, %v908
        %v917 = vcombine.high %v893, %v908
        %v919 = vunpack.c.l.s4 1934713408
        %v920 = vunpack.c.0.s8 %v919
        %v921 = vlaneseq
        %v922 = vshrl.u32 %v921, 7
        %v923 = vsub.s32 %v920, %v922
        %v924 = vrot.slane %v916, %v923
        %v926 = vunpack.c.l.s4 1934713408
        %v927 = vunpack.c.0.s8 %v926
        %v928 = vlaneseq
        %v929 = vshrl.u32 %v928, 7
        %v930 = vsub.s32 %v927, %v929
        %v931 = vrot.slane %v917, %v930
        %v932 = vcombine.low %v900, %v915
        %v933 = vcombine.high %v900, %v915
        %v935 = vunpack.c.l.s4 1934713408
        %v936 = vunpack.c.0.s8 %v935
        %v937 = vlaneseq
        %v938 = vshrl.u32 %v937, 7
        %v939 = vsub.s32 %v936, %v938
        %v940 = vrot.slane %v932, %v939
        %v942 = vunpack.c.l.s4 1934713408
        %v943 = vunpack.c.0.s8 %v942
        %v944 = vlaneseq
        %v945 = vshrl.u32 %v944, 7
        %v946 = vsub.s32 %v943, %v945
        %v947 = vrot.slane %v933, %v946
        %v948 = vcombine.high %v924, 0.0
        %v949 = vcombine.high %v931, 0.0
        %v950 = vcombine.high %v940, 0.0
        %v951 = vcombine.high %v947, 0.0
        %v952 = vcombine.high %v578, 0.0
        %v954 = vunpack.c.l.s4 1983009808
        %v955 = vunpack.c.0.s8 %v954
        %v956 = vlaneseq
        %v957 = vshrl.u32 %v956, 7
        %v958 = vsub.s32 %v955, %v957
        %v959 = vrot.slane %v578, %v958
        %v961 = vunpack.c.l.s4 1983009808
        %v962 = vunpack.c.0.s8 %v961
        %v963 = vlaneseq
        %v964 = vshrl.u32 %v963, 7
        %v965 = vsub.s32 %v962, %v964
        %v966 = vrot.slane %v952, %v965
        %v967 = vcombine.high %v737, 0.0
        %v969 = vunpack.c.l.s4 1983009808
        %v970 = vunpack.c.0.s8 %v969
        %v971 = vlaneseq
        %v972 = vshrl.u32 %v971, 7
        %v973 = vsub.s32 %v970, %v972
        %v974 = vrot.slane %v737, %v973
        %v976 = vunpack.c.l.s4 1983009808
        %v977 = vunpack.c.0.s8 %v976
        %v978 = vlaneseq
        %v979 = vshrl.u32 %v978, 7
        %v980 = vsub.s32 %v977, %v979
        %v981 = vrot.slane %v967, %v980
        %v982 = vcombine.low %v959, %v974
        %v983 = vcombine.high %v959, %v974
        %v985 = vunpack.c.l.s4 1934713408
        %v986 = vunpack.c.0.s8 %v985
        %v987 = vlaneseq
        %v988 = vshrl.u32 %v987, 7
        %v989 = vsub.s32 %v986, %v988
        %v990 = vrot.slane %v982, %v989
        %v992 = vunpack.c.l.s4 1934713408
        %v993 = vunpack.c.0.s8 %v992
        %v994 = vlaneseq
        %v995 = vshrl.u32 %v994, 7
        %v996 = vsub.s32 %v993, %v995
        %v997 = vrot.slane %v983, %v996
        %v998 = vcombine.low %v966, %v981
        %v999 = vcombine.high %v966, %v981
        %v1001 = vunpack.c.l.s4 1934713408
        %v1002 = vunpack.c.0.s8 %v1001
        %v1003 = vlaneseq
        %v1004 = vshrl.u32 %v1003, 7
        %v1005 = vsub.s32 %v1002, %v1004
        %v1006 = vrot.slane %v998, %v1005
        %v1008 = vunpack.c.l.s4 1934713408
        %v1009 = vunpack.c.0.s8 %v1008
        %v1010 = vlaneseq
        %v1011 = vshrl.u32 %v1010, 7
        %v1012 = vsub.s32 %v1009, %v1011
        %v1013 = vrot.slane %v999, %v1012
        %v1014 = vcombine.high %v990, 0.0
        %v1015 = vcombine.high %v997, 0.0
        %v1016 = vcombine.high %v1006, 0.0
        %v1017 = vcombine.high %v1013, 0.0
        %v1018 = vcombine.high %v583, 0.0
        %v1020 = vunpack.c.l.s4 1983009808
        %v1021 = vunpack.c.0.s8 %v1020
        %v1022 = vlaneseq
        %v1023 = vshrl.u32 %v1022, 7
        %v1024 = vsub.s32 %v1021, %v1023
        %v1025 = vrot.slane %v583, %v1024
        %v1027 = vunpack.c.l.s4 1983009808
        %v1028 = vunpack.c.0.s8 %v1027
        %v1029 = vlaneseq
        %v1030 = vshrl.u32 %v1029, 7
        %v1031 = vsub.s32 %v1028, %v1030
        %v1032 = vrot.slane %v1018, %v1031
        %v1033 = vcombine.high %v739, 0.0
        %v1035 = vunpack.c.l.s4 1983009808
        %v1036 = vunpack.c.0.s8 %v1035
        %v1037 = vlaneseq
        %v1038 = vshrl.u32 %v1037, 7
        %v1039 = vsub.s32 %v1036, %v1038
        %v1040 = vrot.slane %v739, %v1039
        %v1042 = vunpack.c.l.s4 1983009808
        %v1043 = vunpack.c.0.s8 %v1042
        %v1044 = vlaneseq
        %v1045 = vshrl.u32 %v1044, 7
        %v1046 = vsub.s32 %v1043, %v1045
        %v1047 = vrot.slane %v1033, %v1046
        %v1048 = vcombine.low %v1025, %v1040
        %v1049 = vcombine.high %v1025, %v1040
        %v1051 = vunpack.c.l.s4 1934713408
        %v1052 = vunpack.c.0.s8 %v1051
        %v1053 = vlaneseq
        %v1054 = vshrl.u32 %v1053, 7
        %v1055 = vsub.s32 %v1052, %v1054
        %v1056 = vrot.slane %v1048, %v1055
        %v1058 = vunpack.c.l.s4 1934713408
        %v1059 = vunpack.c.0.s8 %v1058
        %v1060 = vlaneseq
        %v1061 = vshrl.u32 %v1060, 7
        %v1062 = vsub.s32 %v1059, %v1061
        %v1063 = vrot.slane %v1049, %v1062
        %v1064 = vcombine.low %v1032, %v1047
        %v1065 = vcombine.high %v1032, %v1047
        %v1067 = vunpack.c.l.s4 1934713408
        %v1068 = vunpack.c.0.s8 %v1067
        %v1069 = vlaneseq
        %v1070 = vshrl.u32 %v1069, 7
        %v1071 = vsub.s32 %v1068, %v1070
        %v1072 = vrot.slane %v1064, %v1071
        %v1074 = vunpack.c.l.s4 1934713408
        %v1075 = vunpack.c.0.s8 %v1074
        %v1076 = vlaneseq
        %v1077 = vshrl.u32 %v1076, 7
        %v1078 = vsub.s32 %v1075, %v1077
        %v1079 = vrot.slane %v1065, %v1078
        %v1080 = vcombine.high %v1056, 0.0
        %v1081 = vcombine.high %v1063, 0.0
        %v1082 = vcombine.high %v1072, 0.0
        %v1083 = vcombine.high %v1079, 0.0
        %v1084 = vcombine.high %v588, 0.0
        %v1086 = vunpack.c.l.s4 1983009808
        %v1087 = vunpack.c.0.s8 %v1086
        %v1088 = vlaneseq
        %v1089 = vshrl.u32 %v1088, 7
        %v1090 = vsub.s32 %v1087, %v1089
        %v1091 = vrot.slane %v588, %v1090
        %v1093 = vunpack.c.l.s4 1983009808
        %v1094 = vunpack.c.0.s8 %v1093
        %v1095 = vlaneseq
        %v1096 = vshrl.u32 %v1095, 7
        %v1097 = vsub.s32 %v1094, %v1096
        %v1098 = vrot.slane %v1084, %v1097
        %v1099 = vcombine.high %v741, 0.0
        %v1101 = vunpack.c.l.s4 1983009808
        %v1102 = vunpack.c.0.s8 %v1101
        %v1103 = vlaneseq
        %v1104 = vshrl.u32 %v1103, 7
        %v1105 = vsub.s32 %v1102, %v1104
        %v1106 = vrot.slane %v741, %v1105
        %v1108 = vunpack.c.l.s4 1983009808
        %v1109 = vunpack.c.0.s8 %v1108
        %v1110 = vlaneseq
        %v1111 = vshrl.u32 %v1110, 7
        %v1112 = vsub.s32 %v1109, %v1111
        %v1113 = vrot.slane %v1099, %v1112
        %v1114 = vcombine.low %v1091, %v1106
        %v1115 = vcombine.high %v1091, %v1106
        %v1117 = vunpack.c.l.s4 1934713408
        %v1118 = vunpack.c.0.s8 %v1117
        %v1119 = vlaneseq
        %v1120 = vshrl.u32 %v1119, 7
        %v1121 = vsub.s32 %v1118, %v1120
        %v1122 = vrot.slane %v1114, %v1121
        %v1124 = vunpack.c.l.s4 1934713408
        %v1125 = vunpack.c.0.s8 %v1124
        %v1126 = vlaneseq
        %v1127 = vshrl.u32 %v1126, 7
        %v1128 = vsub.s32 %v1125, %v1127
        %v1129 = vrot.slane %v1115, %v1128
        %v1130 = vcombine.low %v1098, %v1113
        %v1131 = vcombine.high %v1098, %v1113
        %v1133 = vunpack.c.l.s4 1934713408
        %v1134 = vunpack.c.0.s8 %v1133
        %v1135 = vlaneseq
        %v1136 = vshrl.u32 %v1135, 7
        %v1137 = vsub.s32 %v1134, %v1136
        %v1138 = vrot.slane %v1130, %v1137
        %v1140 = vunpack.c.l.s4 1934713408
        %v1141 = vunpack.c.0.s8 %v1140
        %v1142 = vlaneseq
        %v1143 = vshrl.u32 %v1142, 7
        %v1144 = vsub.s32 %v1141, %v1143
        %v1145 = vrot.slane %v1131, %v1144
        %v1146 = vcombine.high %v1122, 0.0
        %v1147 = vcombine.high %v1129, 0.0
        %v1148 = vcombine.high %v1138, 0.0
        %v1149 = vcombine.high %v1145, 0.0
        %v1150 = vcombine.high %v593, 0.0
        %v1152 = vunpack.c.l.s4 1983009808
        %v1153 = vunpack.c.0.s8 %v1152
        %v1154 = vlaneseq
        %v1155 = vshrl.u32 %v1154, 7
        %v1156 = vsub.s32 %v1153, %v1155
        %v1157 = vrot.slane %v593, %v1156
        %v1159 = vunpack.c.l.s4 1983009808
        %v1160 = vunpack.c.0.s8 %v1159
        %v1161 = vlaneseq
        %v1162 = vshrl.u32 %v1161, 7
        %v1163 = vsub.s32 %v1160, %v1162
        %v1164 = vrot.slane %v1150, %v1163
        %v1165 = vcombine.high %v743, 0.0
        %v1167 = vunpack.c.l.s4 1983009808
        %v1168 = vunpack.c.0.s8 %v1167
        %v1169 = vlaneseq
        %v1170 = vshrl.u32 %v1169, 7
        %v1171 = vsub.s32 %v1168, %v1170
        %v1172 = vrot.slane %v743, %v1171
        %v1174 = vunpack.c.l.s4 1983009808
        %v1175 = vunpack.c.0.s8 %v1174
        %v1176 = vlaneseq
        %v1177 = vshrl.u32 %v1176, 7
        %v1178 = vsub.s32 %v1175, %v1177
        %v1179 = vrot.slane %v1165, %v1178
        %v1180 = vcombine.low %v1157, %v1172
        %v1181 = vcombine.high %v1157, %v1172
        %v1183 = vunpack.c.l.s4 1934713408
        %v1184 = vunpack.c.0.s8 %v1183
        %v1185 = vlaneseq
        %v1186 = vshrl.u32 %v1185, 7
        %v1187 = vsub.s32 %v1184, %v1186
        %v1188 = vrot.slane %v1180, %v1187
        %v1190 = vunpack.c.l.s4 1934713408
        %v1191 = vunpack.c.0.s8 %v1190
        %v1192 = vlaneseq
        %v1193 = vshrl.u32 %v1192, 7
        %v1194 = vsub.s32 %v1191, %v1193
        %v1195 = vrot.slane %v1181, %v1194
        %v1196 = vcombine.low %v1164, %v1179
        %v1197 = vcombine.high %v1164, %v1179
        %v1199 = vunpack.c.l.s4 1934713408
        %v1200 = vunpack.c.0.s8 %v1199
        %v1201 = vlaneseq
        %v1202 = vshrl.u32 %v1201, 7
        %v1203 = vsub.s32 %v1200, %v1202
        %v1204 = vrot.slane %v1196, %v1203
        %v1206 = vunpack.c.l.s4 1934713408
        %v1207 = vunpack.c.0.s8 %v1206
        %v1208 = vlaneseq
        %v1209 = vshrl.u32 %v1208, 7
        %v1210 = vsub.s32 %v1207, %v1209
        %v1211 = vrot.slane %v1197, %v1210
        %v1212 = vcombine.high %v1188, 0.0
        %v1213 = vcombine.high %v1195, 0.0
        %v1214 = vcombine.high %v1204, 0.0
        %v1215 = vcombine.high %v1211, 0.0
        %v1216 = vcombine.high %v598, 0.0
        %v1218 = vunpack.c.l.s4 1983009808
        %v1219 = vunpack.c.0.s8 %v1218
        %v1220 = vlaneseq
        %v1221 = vshrl.u32 %v1220, 7
        %v1222 = vsub.s32 %v1219, %v1221
        %v1223 = vrot.slane %v598, %v1222
        %v1225 = vunpack.c.l.s4 1983009808
        %v1226 = vunpack.c.0.s8 %v1225
        %v1227 = vlaneseq
        %v1228 = vshrl.u32 %v1227, 7
        %v1229 = vsub.s32 %v1226, %v1228
        %v1230 = vrot.slane %v1216, %v1229
        %v1231 = vcombine.high %v745, 0.0
        %v1233 = vunpack.c.l.s4 1983009808
        %v1234 = vunpack.c.0.s8 %v1233
        %v1235 = vlaneseq
        %v1236 = vshrl.u32 %v1235, 7
        %v1237 = vsub.s32 %v1234, %v1236
        %v1238 = vrot.slane %v745, %v1237
        %v1240 = vunpack.c.l.s4 1983009808
        %v1241 = vunpack.c.0.s8 %v1240
        %v1242 = vlaneseq
        %v1243 = vshrl.u32 %v1242, 7
        %v1244 = vsub.s32 %v1241, %v1243
        %v1245 = vrot.slane %v1231, %v1244
        %v1246 = vcombine.low %v1223, %v1238
        %v1247 = vcombine.high %v1223, %v1238
        %v1249 = vunpack.c.l.s4 1934713408
        %v1250 = vunpack.c.0.s8 %v1249
        %v1251 = vlaneseq
        %v1252 = vshrl.u32 %v1251, 7
        %v1253 = vsub.s32 %v1250, %v1252
        %v1254 = vrot.slane %v1246, %v1253
        %v1256 = vunpack.c.l.s4 1934713408
        %v1257 = vunpack.c.0.s8 %v1256
        %v1258 = vlaneseq
        %v1259 = vshrl.u32 %v1258, 7
        %v1260 = vsub.s32 %v1257, %v1259
        %v1261 = vrot.slane %v1247, %v1260
        %v1262 = vcombine.low %v1230, %v1245
        %v1263 = vcombine.high %v1230, %v1245
        %v1265 = vunpack.c.l.s4 1934713408
        %v1266 = vunpack.c.0.s8 %v1265
        %v1267 = vlaneseq
        %v1268 = vshrl.u32 %v1267, 7
        %v1269 = vsub.s32 %v1266, %v1268
        %v1270 = vrot.slane %v1262, %v1269
        %v1272 = vunpack.c.l.s4 1934713408
        %v1273 = vunpack.c.0.s8 %v1272
        %v1274 = vlaneseq
        %v1275 = vshrl.u32 %v1274, 7
        %v1276 = vsub.s32 %v1273, %v1275
        %v1277 = vrot.slane %v1263, %v1276
        %v1278 = vcombine.high %v1254, 0.0
        %v1279 = vcombine.high %v1261, 0.0
        %v1280 = vcombine.high %v1270, 0.0
        %v1281 = vcombine.high %v1277, 0.0
        %vm1282 = vcmask 517120
        %1283 = vst.msk [vmem:[%s341] sm:$0x3] %vm1282, %v792
        %1284 = vst.msk [vmem:[%s341 + $0x2] sm:$0x3] %vm1282, %v816
        %1285 = vst.msk [vmem:[%s341 + $0x4] sm:$0x3] %vm1282, %v799
        %1286 = vst.msk [vmem:[%s341 + $0x6] sm:$0x3] %vm1282, %v817
        %1287 = vst.msk [vmem:[%s341 + $0x8] sm:$0x3] %vm1282, %v808
        %1288 = vst.msk [vmem:[%s341 + $0xa] sm:$0x3] %vm1282, %v818
        %1289 = vst.msk [vmem:[%s341 + $0xc] sm:$0x3] %vm1282, %v815
        %1290 = vst.msk [vmem:[%s341 + $0xe] sm:$0x3] %vm1282, %v819
        %1291 = vst.msk [vmem:[%s341 + $0x10] sm:$0x3] %vm1282, %v858
        %1292 = vst.msk [vmem:[%s341 + $0x12] sm:$0x3] %vm1282, %v882
        %1293 = vst.msk [vmem:[%s341 + $0x14] sm:$0x3] %vm1282, %v865
        %1294 = vst.msk [vmem:[%s341 + $0x16] sm:$0x3] %vm1282, %v883
        %1295 = vst.msk [vmem:[%s341 + $0x18] sm:$0x3] %vm1282, %v874
        %1296 = vst.msk [vmem:[%s341 + $0x1a] sm:$0x3] %vm1282, %v884
        %1297 = vst.msk [vmem:[%s341 + $0x1c] sm:$0x3] %vm1282, %v881
        %1298 = vst.msk [vmem:[%s341 + $0x1e] sm:$0x3] %vm1282, %v885
        %1299 = vst.msk [vmem:[%s341 + $0x20] sm:$0x3] %vm1282, %v924
        %1300 = vst.msk [vmem:[%s341 + $0x22] sm:$0x3] %vm1282, %v948
        %1301 = vst.msk [vmem:[%s341 + $0x24] sm:$0x3] %vm1282, %v931
        %1302 = vst.msk [vmem:[%s341 + $0x26] sm:$0x3] %vm1282, %v949
        %1303 = vst.msk [vmem:[%s341 + $0x28] sm:$0x3] %vm1282, %v940
        %1304 = vst.msk [vmem:[%s341 + $0x2a] sm:$0x3] %vm1282, %v950
        %1305 = vst.msk [vmem:[%s341 + $0x2c] sm:$0x3] %vm1282, %v947
        %1306 = vst.msk [vmem:[%s341 + $0x2e] sm:$0x3] %vm1282, %v951
        %1307 = vst.msk [vmem:[%s341 + $0x30] sm:$0x3] %vm1282, %v990
        %1308 = vst.msk [vmem:[%s341 + $0x32] sm:$0x3] %vm1282, %v1014
        %1309 = vst.msk [vmem:[%s341 + $0x34] sm:$0x3] %vm1282, %v997
        %1310 = vst.msk [vmem:[%s341 + $0x36] sm:$0x3] %vm1282, %v1015
        %1311 = vst.msk [vmem:[%s341 + $0x38] sm:$0x3] %vm1282, %v1006
        %1312 = vst.msk [vmem:[%s341 + $0x3a] sm:$0x3] %vm1282, %v1016
        %1313 = vst.msk [vmem:[%s341 + $0x3c] sm:$0x3] %vm1282, %v1013
        %1314 = vst.msk [vmem:[%s341 + $0x3e] sm:$0x3] %vm1282, %v1017
        %1315 = vst.msk [vmem:[%s341 + $0x40] sm:$0x3] %vm1282, %v1056
        %1316 = vst.msk [vmem:[%s341 + $0x42] sm:$0x3] %vm1282, %v1080
        %1317 = vst.msk [vmem:[%s341 + $0x44] sm:$0x3] %vm1282, %v1063
        %1318 = vst.msk [vmem:[%s341 + $0x46] sm:$0x3] %vm1282, %v1081
        %1319 = vst.msk [vmem:[%s341 + $0x48] sm:$0x3] %vm1282, %v1072
        %1320 = vst.msk [vmem:[%s341 + $0x4a] sm:$0x3] %vm1282, %v1082
        %1321 = vst.msk [vmem:[%s341 + $0x4c] sm:$0x3] %vm1282, %v1079
        %1322 = vst.msk [vmem:[%s341 + $0x4e] sm:$0x3] %vm1282, %v1083
        %1323 = vst.msk [vmem:[%s341 + $0x50] sm:$0x3] %vm1282, %v1122
        %1324 = vst.msk [vmem:[%s341 + $0x52] sm:$0x3] %vm1282, %v1146
        %1325 = vst.msk [vmem:[%s341 + $0x54] sm:$0x3] %vm1282, %v1129
        %1326 = vst.msk [vmem:[%s341 + $0x56] sm:$0x3] %vm1282, %v1147
        %1327 = vst.msk [vmem:[%s341 + $0x58] sm:$0x3] %vm1282, %v1138
        %1328 = vst.msk [vmem:[%s341 + $0x5a] sm:$0x3] %vm1282, %v1148
        %1329 = vst.msk [vmem:[%s341 + $0x5c] sm:$0x3] %vm1282, %v1145
        %1330 = vst.msk [vmem:[%s341 + $0x5e] sm:$0x3] %vm1282, %v1149
        %1331 = vst.msk [vmem:[%s341 + $0x60] sm:$0x3] %vm1282, %v1188
        %1332 = vst.msk [vmem:[%s341 + $0x62] sm:$0x3] %vm1282, %v1212
        %1333 = vst.msk [vmem:[%s341 + $0x64] sm:$0x3] %vm1282, %v1195
        %1334 = vst.msk [vmem:[%s341 + $0x66] sm:$0x3] %vm1282, %v1213
        %1335 = vst.msk [vmem:[%s341 + $0x68] sm:$0x3] %vm1282, %v1204
        %1336 = vst.msk [vmem:[%s341 + $0x6a] sm:$0x3] %vm1282, %v1214
        %1337 = vst.msk [vmem:[%s341 + $0x6c] sm:$0x3] %vm1282, %v1211
        %1338 = vst.msk [vmem:[%s341 + $0x6e] sm:$0x3] %vm1282, %v1215
        %1339 = vst.msk [vmem:[%s341 + $0x70] sm:$0x3] %vm1282, %v1254
        %1340 = vst.msk [vmem:[%s341 + $0x72] sm:$0x3] %vm1282, %v1278
        %1341 = vst.msk [vmem:[%s341 + $0x74] sm:$0x3] %vm1282, %v1261
        %1342 = vst.msk [vmem:[%s341 + $0x76] sm:$0x3] %vm1282, %v1279
        %1343 = vst.msk [vmem:[%s341 + $0x78] sm:$0x3] %vm1282, %v1270
        %1344 = vst.msk [vmem:[%s341 + $0x7a] sm:$0x3] %vm1282, %v1280
        %1345 = vst.msk [vmem:[%s341 + $0x7c] sm:$0x3] %vm1282, %v1277
        %1346 = vst.msk [vmem:[%s341 + $0x7e] sm:$0x3] %vm1282, %v1281
        %1355 = vrot.lane.b32.xlu0 %v684, 64
        %v1356 = vpop.permute.xlu0 %1355
        %1357 = vrot.lane.b32.xlu0 %v689, 64
        %v1358 = vpop.permute.xlu0 %1357
        %1359 = vrot.lane.b32.xlu0 %v694, 64
        %v1360 = vpop.permute.xlu0 %1359
        %1361 = vrot.lane.b32.xlu0 %v699, 64
        %v1362 = vpop.permute.xlu0 %1361
        %1363 = vrot.lane.b32.xlu0 %v704, 64
        %v1364 = vpop.permute.xlu0 %1363
        %1365 = vrot.lane.b32.xlu0 %v709, 64
        %v1366 = vpop.permute.xlu0 %1365
        %1367 = vrot.lane.b32.xlu0 %v714, 64
        %v1368 = vpop.permute.xlu0 %1367
        %1369 = vrot.lane.b32.xlu0 %v719, 64
        %v1370 = vpop.permute.xlu0 %1369
        %v1379 = vcombine.high %v684, 0.0
        %v1381 = vunpack.c.l.s4 1983009808
        %v1382 = vunpack.c.0.s8 %v1381
        %v1383 = vlaneseq
        %v1384 = vshrl.u32 %v1383, 7
        %v1385 = vsub.s32 %v1382, %v1384
        %v1386 = vrot.slane %v684, %v1385
        %v1388 = vunpack.c.l.s4 1983009808
        %v1389 = vunpack.c.0.s8 %v1388
        %v1390 = vlaneseq
        %v1391 = vshrl.u32 %v1390, 7
        %v1392 = vsub.s32 %v1389, %v1391
        %v1393 = vrot.slane %v1379, %v1392
        %v1394 = vcombine.high %v1356, 0.0
        %v1396 = vunpack.c.l.s4 1983009808
        %v1397 = vunpack.c.0.s8 %v1396
        %v1398 = vlaneseq
        %v1399 = vshrl.u32 %v1398, 7
        %v1400 = vsub.s32 %v1397, %v1399
        %v1401 = vrot.slane %v1356, %v1400
        %v1403 = vunpack.c.l.s4 1983009808
        %v1404 = vunpack.c.0.s8 %v1403
        %v1405 = vlaneseq
        %v1406 = vshrl.u32 %v1405, 7
        %v1407 = vsub.s32 %v1404, %v1406
        %v1408 = vrot.slane %v1394, %v1407
        %v1409 = vcombine.low %v1386, %v1401
        %v1410 = vcombine.high %v1386, %v1401
        %v1412 = vunpack.c.l.s4 1934713408
        %v1413 = vunpack.c.0.s8 %v1412
        %v1414 = vlaneseq
        %v1415 = vshrl.u32 %v1414, 7
        %v1416 = vsub.s32 %v1413, %v1415
        %v1417 = vrot.slane %v1409, %v1416
        %v1419 = vunpack.c.l.s4 1934713408
        %v1420 = vunpack.c.0.s8 %v1419
        %v1421 = vlaneseq
        %v1422 = vshrl.u32 %v1421, 7
        %v1423 = vsub.s32 %v1420, %v1422
        %v1424 = vrot.slane %v1410, %v1423
        %v1425 = vcombine.low %v1393, %v1408
        %v1426 = vcombine.high %v1393, %v1408
        %v1428 = vunpack.c.l.s4 1934713408
        %v1429 = vunpack.c.0.s8 %v1428
        %v1430 = vlaneseq
        %v1431 = vshrl.u32 %v1430, 7
        %v1432 = vsub.s32 %v1429, %v1431
        %v1433 = vrot.slane %v1425, %v1432
        %v1435 = vunpack.c.l.s4 1934713408
        %v1436 = vunpack.c.0.s8 %v1435
        %v1437 = vlaneseq
        %v1438 = vshrl.u32 %v1437, 7
        %v1439 = vsub.s32 %v1436, %v1438
        %v1440 = vrot.slane %v1426, %v1439
        %v1441 = vcombine.high %v1417, 0.0
        %v1442 = vcombine.high %v1424, 0.0
        %v1443 = vcombine.high %v1433, 0.0
        %v1444 = vcombine.high %v1440, 0.0
        %v1445 = vcombine.high %v689, 0.0
        %v1447 = vunpack.c.l.s4 1983009808
        %v1448 = vunpack.c.0.s8 %v1447
        %v1449 = vlaneseq
        %v1450 = vshrl.u32 %v1449, 7
        %v1451 = vsub.s32 %v1448, %v1450
        %v1452 = vrot.slane %v689, %v1451
        %v1454 = vunpack.c.l.s4 1983009808
        %v1455 = vunpack.c.0.s8 %v1454
        %v1456 = vlaneseq
        %v1457 = vshrl.u32 %v1456, 7
        %v1458 = vsub.s32 %v1455, %v1457
        %v1459 = vrot.slane %v1445, %v1458
        %v1460 = vcombine.high %v1358, 0.0
        %v1462 = vunpack.c.l.s4 1983009808
        %v1463 = vunpack.c.0.s8 %v1462
        %v1464 = vlaneseq
        %v1465 = vshrl.u32 %v1464, 7
        %v1466 = vsub.s32 %v1463, %v1465
        %v1467 = vrot.slane %v1358, %v1466
        %v1469 = vunpack.c.l.s4 1983009808
        %v1470 = vunpack.c.0.s8 %v1469
        %v1471 = vlaneseq
        %v1472 = vshrl.u32 %v1471, 7
        %v1473 = vsub.s32 %v1470, %v1472
        %v1474 = vrot.slane %v1460, %v1473
        %v1475 = vcombine.low %v1452, %v1467
        %v1476 = vcombine.high %v1452, %v1467
        %v1478 = vunpack.c.l.s4 1934713408
        %v1479 = vunpack.c.0.s8 %v1478
        %v1480 = vlaneseq
        %v1481 = vshrl.u32 %v1480, 7
        %v1482 = vsub.s32 %v1479, %v1481
        %v1483 = vrot.slane %v1475, %v1482
        %v1485 = vunpack.c.l.s4 1934713408
        %v1486 = vunpack.c.0.s8 %v1485
        %v1487 = vlaneseq
        %v1488 = vshrl.u32 %v1487, 7
        %v1489 = vsub.s32 %v1486, %v1488
        %v1490 = vrot.slane %v1476, %v1489
        %v1491 = vcombine.low %v1459, %v1474
        %v1492 = vcombine.high %v1459, %v1474
        %v1494 = vunpack.c.l.s4 1934713408
        %v1495 = vunpack.c.0.s8 %v1494
        %v1496 = vlaneseq
        %v1497 = vshrl.u32 %v1496, 7
        %v1498 = vsub.s32 %v1495, %v1497
        %v1499 = vrot.slane %v1491, %v1498
        %v1501 = vunpack.c.l.s4 1934713408
        %v1502 = vunpack.c.0.s8 %v1501
        %v1503 = vlaneseq
        %v1504 = vshrl.u32 %v1503, 7
        %v1505 = vsub.s32 %v1502, %v1504
        %v1506 = vrot.slane %v1492, %v1505
        %v1507 = vcombine.high %v1483, 0.0
        %v1508 = vcombine.high %v1490, 0.0
        %v1509 = vcombine.high %v1499, 0.0
        %v1510 = vcombine.high %v1506, 0.0
        %v1511 = vcombine.high %v694, 0.0
        %v1513 = vunpack.c.l.s4 1983009808
        %v1514 = vunpack.c.0.s8 %v1513
        %v1515 = vlaneseq
        %v1516 = vshrl.u32 %v1515, 7
        %v1517 = vsub.s32 %v1514, %v1516
        %v1518 = vrot.slane %v694, %v1517
        %v1520 = vunpack.c.l.s4 1983009808
        %v1521 = vunpack.c.0.s8 %v1520
        %v1522 = vlaneseq
        %v1523 = vshrl.u32 %v1522, 7
        %v1524 = vsub.s32 %v1521, %v1523
        %v1525 = vrot.slane %v1511, %v1524
        %v1526 = vcombine.high %v1360, 0.0
        %v1528 = vunpack.c.l.s4 1983009808
        %v1529 = vunpack.c.0.s8 %v1528
        %v1530 = vlaneseq
        %v1531 = vshrl.u32 %v1530, 7
        %v1532 = vsub.s32 %v1529, %v1531
        %v1533 = vrot.slane %v1360, %v1532
        %v1535 = vunpack.c.l.s4 1983009808
        %v1536 = vunpack.c.0.s8 %v1535
        %v1537 = vlaneseq
        %v1538 = vshrl.u32 %v1537, 7
        %v1539 = vsub.s32 %v1536, %v1538
        %v1540 = vrot.slane %v1526, %v1539
        %v1541 = vcombine.low %v1518, %v1533
        %v1542 = vcombine.high %v1518, %v1533
        %v1544 = vunpack.c.l.s4 1934713408
        %v1545 = vunpack.c.0.s8 %v1544
        %v1546 = vlaneseq
        %v1547 = vshrl.u32 %v1546, 7
        %v1548 = vsub.s32 %v1545, %v1547
        %v1549 = vrot.slane %v1541, %v1548
        %v1551 = vunpack.c.l.s4 1934713408
        %v1552 = vunpack.c.0.s8 %v1551
        %v1553 = vlaneseq
        %v1554 = vshrl.u32 %v1553, 7
        %v1555 = vsub.s32 %v1552, %v1554
        %v1556 = vrot.slane %v1542, %v1555
        %v1557 = vcombine.low %v1525, %v1540
        %v1558 = vcombine.high %v1525, %v1540
        %v1560 = vunpack.c.l.s4 1934713408
        %v1561 = vunpack.c.0.s8 %v1560
        %v1562 = vlaneseq
        %v1563 = vshrl.u32 %v1562, 7
        %v1564 = vsub.s32 %v1561, %v1563
        %v1565 = vrot.slane %v1557, %v1564
        %v1567 = vunpack.c.l.s4 1934713408
        %v1568 = vunpack.c.0.s8 %v1567
        %v1569 = vlaneseq
        %v1570 = vshrl.u32 %v1569, 7
        %v1571 = vsub.s32 %v1568, %v1570
        %v1572 = vrot.slane %v1558, %v1571
        %v1573 = vcombine.high %v1549, 0.0
        %v1574 = vcombine.high %v1556, 0.0
        %v1575 = vcombine.high %v1565, 0.0
        %v1576 = vcombine.high %v1572, 0.0
        %v1577 = vcombine.high %v699, 0.0
        %v1579 = vunpack.c.l.s4 1983009808
        %v1580 = vunpack.c.0.s8 %v1579
        %v1581 = vlaneseq
        %v1582 = vshrl.u32 %v1581, 7
        %v1583 = vsub.s32 %v1580, %v1582
        %v1584 = vrot.slane %v699, %v1583
        %v1586 = vunpack.c.l.s4 1983009808
        %v1587 = vunpack.c.0.s8 %v1586
        %v1588 = vlaneseq
        %v1589 = vshrl.u32 %v1588, 7
        %v1590 = vsub.s32 %v1587, %v1589
        %v1591 = vrot.slane %v1577, %v1590
        %v1592 = vcombine.high %v1362, 0.0
        %v1594 = vunpack.c.l.s4 1983009808
        %v1595 = vunpack.c.0.s8 %v1594
        %v1596 = vlaneseq
        %v1597 = vshrl.u32 %v1596, 7
        %v1598 = vsub.s32 %v1595, %v1597
        %v1599 = vrot.slane %v1362, %v1598
        %v1601 = vunpack.c.l.s4 1983009808
        %v1602 = vunpack.c.0.s8 %v1601
        %v1603 = vlaneseq
        %v1604 = vshrl.u32 %v1603, 7
        %v1605 = vsub.s32 %v1602, %v1604
        %v1606 = vrot.slane %v1592, %v1605
        %v1607 = vcombine.low %v1584, %v1599
        %v1608 = vcombine.high %v1584, %v1599
        %v1610 = vunpack.c.l.s4 1934713408
        %v1611 = vunpack.c.0.s8 %v1610
        %v1612 = vlaneseq
        %v1613 = vshrl.u32 %v1612, 7
        %v1614 = vsub.s32 %v1611, %v1613
        %v1615 = vrot.slane %v1607, %v1614
        %v1617 = vunpack.c.l.s4 1934713408
        %v1618 = vunpack.c.0.s8 %v1617
        %v1619 = vlaneseq
        %v1620 = vshrl.u32 %v1619, 7
        %v1621 = vsub.s32 %v1618, %v1620
        %v1622 = vrot.slane %v1608, %v1621
        %v1623 = vcombine.low %v1591, %v1606
        %v1624 = vcombine.high %v1591, %v1606
        %v1626 = vunpack.c.l.s4 1934713408
        %v1627 = vunpack.c.0.s8 %v1626
        %v1628 = vlaneseq
        %v1629 = vshrl.u32 %v1628, 7
        %v1630 = vsub.s32 %v1627, %v1629
        %v1631 = vrot.slane %v1623, %v1630
        %v1633 = vunpack.c.l.s4 1934713408
        %v1634 = vunpack.c.0.s8 %v1633
        %v1635 = vlaneseq
        %v1636 = vshrl.u32 %v1635, 7
        %v1637 = vsub.s32 %v1634, %v1636
        %v1638 = vrot.slane %v1624, %v1637
        %v1639 = vcombine.high %v1615, 0.0
        %v1640 = vcombine.high %v1622, 0.0
        %v1641 = vcombine.high %v1631, 0.0
        %v1642 = vcombine.high %v1638, 0.0
        %v1643 = vcombine.high %v704, 0.0
        %v1645 = vunpack.c.l.s4 1983009808
        %v1646 = vunpack.c.0.s8 %v1645
        %v1647 = vlaneseq
        %v1648 = vshrl.u32 %v1647, 7
        %v1649 = vsub.s32 %v1646, %v1648
        %v1650 = vrot.slane %v704, %v1649
        %v1652 = vunpack.c.l.s4 1983009808
        %v1653 = vunpack.c.0.s8 %v1652
        %v1654 = vlaneseq
        %v1655 = vshrl.u32 %v1654, 7
        %v1656 = vsub.s32 %v1653, %v1655
        %v1657 = vrot.slane %v1643, %v1656
        %v1658 = vcombine.high %v1364, 0.0
        %v1660 = vunpack.c.l.s4 1983009808
        %v1661 = vunpack.c.0.s8 %v1660
        %v1662 = vlaneseq
        %v1663 = vshrl.u32 %v1662, 7
        %v1664 = vsub.s32 %v1661, %v1663
        %v1665 = vrot.slane %v1364, %v1664
        %v1667 = vunpack.c.l.s4 1983009808
        %v1668 = vunpack.c.0.s8 %v1667
        %v1669 = vlaneseq
        %v1670 = vshrl.u32 %v1669, 7
        %v1671 = vsub.s32 %v1668, %v1670
        %v1672 = vrot.slane %v1658, %v1671
        %v1673 = vcombine.low %v1650, %v1665
        %v1674 = vcombine.high %v1650, %v1665
        %v1676 = vunpack.c.l.s4 1934713408
        %v1677 = vunpack.c.0.s8 %v1676
        %v1678 = vlaneseq
        %v1679 = vshrl.u32 %v1678, 7
        %v1680 = vsub.s32 %v1677, %v1679
        %v1681 = vrot.slane %v1673, %v1680
        %v1683 = vunpack.c.l.s4 1934713408
        %v1684 = vunpack.c.0.s8 %v1683
        %v1685 = vlaneseq
        %v1686 = vshrl.u32 %v1685, 7
        %v1687 = vsub.s32 %v1684, %v1686
        %v1688 = vrot.slane %v1674, %v1687
        %v1689 = vcombine.low %v1657, %v1672
        %v1690 = vcombine.high %v1657, %v1672
        %v1692 = vunpack.c.l.s4 1934713408
        %v1693 = vunpack.c.0.s8 %v1692
        %v1694 = vlaneseq
        %v1695 = vshrl.u32 %v1694, 7
        %v1696 = vsub.s32 %v1693, %v1695
        %v1697 = vrot.slane %v1689, %v1696
        %v1699 = vunpack.c.l.s4 1934713408
        %v1700 = vunpack.c.0.s8 %v1699
        %v1701 = vlaneseq
        %v1702 = vshrl.u32 %v1701, 7
        %v1703 = vsub.s32 %v1700, %v1702
        %v1704 = vrot.slane %v1690, %v1703
        %v1705 = vcombine.high %v1681, 0.0
        %v1706 = vcombine.high %v1688, 0.0
        %v1707 = vcombine.high %v1697, 0.0
        %v1708 = vcombine.high %v1704, 0.0
        %v1709 = vcombine.high %v709, 0.0
        %v1711 = vunpack.c.l.s4 1983009808
        %v1712 = vunpack.c.0.s8 %v1711
        %v1713 = vlaneseq
        %v1714 = vshrl.u32 %v1713, 7
        %v1715 = vsub.s32 %v1712, %v1714
        %v1716 = vrot.slane %v709, %v1715
        %v1718 = vunpack.c.l.s4 1983009808
        %v1719 = vunpack.c.0.s8 %v1718
        %v1720 = vlaneseq
        %v1721 = vshrl.u32 %v1720, 7
        %v1722 = vsub.s32 %v1719, %v1721
        %v1723 = vrot.slane %v1709, %v1722
        %v1724 = vcombine.high %v1366, 0.0
        %v1726 = vunpack.c.l.s4 1983009808
        %v1727 = vunpack.c.0.s8 %v1726
        %v1728 = vlaneseq
        %v1729 = vshrl.u32 %v1728, 7
        %v1730 = vsub.s32 %v1727, %v1729
        %v1731 = vrot.slane %v1366, %v1730
        %v1733 = vunpack.c.l.s4 1983009808
        %v1734 = vunpack.c.0.s8 %v1733
        %v1735 = vlaneseq
        %v1736 = vshrl.u32 %v1735, 7
        %v1737 = vsub.s32 %v1734, %v1736
        %v1738 = vrot.slane %v1724, %v1737
        %v1739 = vcombine.low %v1716, %v1731
        %v1740 = vcombine.high %v1716, %v1731
        %v1742 = vunpack.c.l.s4 1934713408
        %v1743 = vunpack.c.0.s8 %v1742
        %v1744 = vlaneseq
        %v1745 = vshrl.u32 %v1744, 7
        %v1746 = vsub.s32 %v1743, %v1745
        %v1747 = vrot.slane %v1739, %v1746
        %v1749 = vunpack.c.l.s4 1934713408
        %v1750 = vunpack.c.0.s8 %v1749
        %v1751 = vlaneseq
        %v1752 = vshrl.u32 %v1751, 7
        %v1753 = vsub.s32 %v1750, %v1752
        %v1754 = vrot.slane %v1740, %v1753
        %v1755 = vcombine.low %v1723, %v1738
        %v1756 = vcombine.high %v1723, %v1738
        %v1758 = vunpack.c.l.s4 1934713408
        %v1759 = vunpack.c.0.s8 %v1758
        %v1760 = vlaneseq
        %v1761 = vshrl.u32 %v1760, 7
        %v1762 = vsub.s32 %v1759, %v1761
        %v1763 = vrot.slane %v1755, %v1762
        %v1765 = vunpack.c.l.s4 1934713408
        %v1766 = vunpack.c.0.s8 %v1765
        %v1767 = vlaneseq
        %v1768 = vshrl.u32 %v1767, 7
        %v1769 = vsub.s32 %v1766, %v1768
        %v1770 = vrot.slane %v1756, %v1769
        %v1771 = vcombine.high %v1747, 0.0
        %v1772 = vcombine.high %v1754, 0.0
        %v1773 = vcombine.high %v1763, 0.0
        %v1774 = vcombine.high %v1770, 0.0
        %v1775 = vcombine.high %v714, 0.0
        %v1777 = vunpack.c.l.s4 1983009808
        %v1778 = vunpack.c.0.s8 %v1777
        %v1779 = vlaneseq
        %v1780 = vshrl.u32 %v1779, 7
        %v1781 = vsub.s32 %v1778, %v1780
        %v1782 = vrot.slane %v714, %v1781
        %v1784 = vunpack.c.l.s4 1983009808
        %v1785 = vunpack.c.0.s8 %v1784
        %v1786 = vlaneseq
        %v1787 = vshrl.u32 %v1786, 7
        %v1788 = vsub.s32 %v1785, %v1787
        %v1789 = vrot.slane %v1775, %v1788
        %v1790 = vcombine.high %v1368, 0.0
        %v1792 = vunpack.c.l.s4 1983009808
        %v1793 = vunpack.c.0.s8 %v1792
        %v1794 = vlaneseq
        %v1795 = vshrl.u32 %v1794, 7
        %v1796 = vsub.s32 %v1793, %v1795
        %v1797 = vrot.slane %v1368, %v1796
        %v1799 = vunpack.c.l.s4 1983009808
        %v1800 = vunpack.c.0.s8 %v1799
        %v1801 = vlaneseq
        %v1802 = vshrl.u32 %v1801, 7
        %v1803 = vsub.s32 %v1800, %v1802
        %v1804 = vrot.slane %v1790, %v1803
        %v1805 = vcombine.low %v1782, %v1797
        %v1806 = vcombine.high %v1782, %v1797
        %v1808 = vunpack.c.l.s4 1934713408
        %v1809 = vunpack.c.0.s8 %v1808
        %v1810 = vlaneseq
        %v1811 = vshrl.u32 %v1810, 7
        %v1812 = vsub.s32 %v1809, %v1811
        %v1813 = vrot.slane %v1805, %v1812
        %v1815 = vunpack.c.l.s4 1934713408
        %v1816 = vunpack.c.0.s8 %v1815
        %v1817 = vlaneseq
        %v1818 = vshrl.u32 %v1817, 7
        %v1819 = vsub.s32 %v1816, %v1818
        %v1820 = vrot.slane %v1806, %v1819
        %v1821 = vcombine.low %v1789, %v1804
        %v1822 = vcombine.high %v1789, %v1804
        %v1824 = vunpack.c.l.s4 1934713408
        %v1825 = vunpack.c.0.s8 %v1824
        %v1826 = vlaneseq
        %v1827 = vshrl.u32 %v1826, 7
        %v1828 = vsub.s32 %v1825, %v1827
        %v1829 = vrot.slane %v1821, %v1828
        %v1831 = vunpack.c.l.s4 1934713408
        %v1832 = vunpack.c.0.s8 %v1831
        %v1833 = vlaneseq
        %v1834 = vshrl.u32 %v1833, 7
        %v1835 = vsub.s32 %v1832, %v1834
        %v1836 = vrot.slane %v1822, %v1835
        %v1837 = vcombine.high %v1813, 0.0
        %v1838 = vcombine.high %v1820, 0.0
        %v1839 = vcombine.high %v1829, 0.0
        %v1840 = vcombine.high %v1836, 0.0
        %v1841 = vcombine.high %v719, 0.0
        %v1843 = vunpack.c.l.s4 1983009808
        %v1844 = vunpack.c.0.s8 %v1843
        %v1845 = vlaneseq
        %v1846 = vshrl.u32 %v1845, 7
        %v1847 = vsub.s32 %v1844, %v1846
        %v1848 = vrot.slane %v719, %v1847
        %v1850 = vunpack.c.l.s4 1983009808
        %v1851 = vunpack.c.0.s8 %v1850
        %v1852 = vlaneseq
        %v1853 = vshrl.u32 %v1852, 7
        %v1854 = vsub.s32 %v1851, %v1853
        %v1855 = vrot.slane %v1841, %v1854
        %v1856 = vcombine.high %v1370, 0.0
        %v1858 = vunpack.c.l.s4 1983009808
        %v1859 = vunpack.c.0.s8 %v1858
        %v1860 = vlaneseq
        %v1861 = vshrl.u32 %v1860, 7
        %v1862 = vsub.s32 %v1859, %v1861
        %v1863 = vrot.slane %v1370, %v1862
        %v1865 = vunpack.c.l.s4 1983009808
        %v1866 = vunpack.c.0.s8 %v1865
        %v1867 = vlaneseq
        %v1868 = vshrl.u32 %v1867, 7
        %v1869 = vsub.s32 %v1866, %v1868
        %v1870 = vrot.slane %v1856, %v1869
        %v1871 = vcombine.low %v1848, %v1863
        %v1872 = vcombine.high %v1848, %v1863
        %v1874 = vunpack.c.l.s4 1934713408
        %v1875 = vunpack.c.0.s8 %v1874
        %v1876 = vlaneseq
        %v1877 = vshrl.u32 %v1876, 7
        %v1878 = vsub.s32 %v1875, %v1877
        %v1879 = vrot.slane %v1871, %v1878
        %v1881 = vunpack.c.l.s4 1934713408
        %v1882 = vunpack.c.0.s8 %v1881
        %v1883 = vlaneseq
        %v1884 = vshrl.u32 %v1883, 7
        %v1885 = vsub.s32 %v1882, %v1884
        %v1886 = vrot.slane %v1872, %v1885
        %v1887 = vcombine.low %v1855, %v1870
        %v1888 = vcombine.high %v1855, %v1870
        %v1890 = vunpack.c.l.s4 1934713408
        %v1891 = vunpack.c.0.s8 %v1890
        %v1892 = vlaneseq
        %v1893 = vshrl.u32 %v1892, 7
        %v1894 = vsub.s32 %v1891, %v1893
        %v1895 = vrot.slane %v1887, %v1894
        %v1897 = vunpack.c.l.s4 1934713408
        %v1898 = vunpack.c.0.s8 %v1897
        %v1899 = vlaneseq
        %v1900 = vshrl.u32 %v1899, 7
        %v1901 = vsub.s32 %v1898, %v1900
        %v1902 = vrot.slane %v1888, %v1901
        %v1903 = vcombine.high %v1879, 0.0
        %v1904 = vcombine.high %v1886, 0.0
        %v1905 = vcombine.high %v1895, 0.0
        %v1906 = vcombine.high %v1902, 0.0
        %1907 = vst.msk [vmem:[%s351] sm:$0x3] %vm1282, %v1417
        %1908 = vst.msk [vmem:[%s351 + $0x2] sm:$0x3] %vm1282, %v1441
        %1909 = vst.msk [vmem:[%s351 + $0x4] sm:$0x3] %vm1282, %v1424
        %1910 = vst.msk [vmem:[%s351 + $0x6] sm:$0x3] %vm1282, %v1442
        %1911 = vst.msk [vmem:[%s351 + $0x8] sm:$0x3] %vm1282, %v1433
        %1912 = vst.msk [vmem:[%s351 + $0xa] sm:$0x3] %vm1282, %v1443
        %1913 = vst.msk [vmem:[%s351 + $0xc] sm:$0x3] %vm1282, %v1440
        %1914 = vst.msk [vmem:[%s351 + $0xe] sm:$0x3] %vm1282, %v1444
        %1915 = vst.msk [vmem:[%s351 + $0x10] sm:$0x3] %vm1282, %v1483
        %1916 = vst.msk [vmem:[%s351 + $0x12] sm:$0x3] %vm1282, %v1507
        %1917 = vst.msk [vmem:[%s351 + $0x14] sm:$0x3] %vm1282, %v1490
        %1918 = vst.msk [vmem:[%s351 + $0x16] sm:$0x3] %vm1282, %v1508
        %1919 = vst.msk [vmem:[%s351 + $0x18] sm:$0x3] %vm1282, %v1499
        %1920 = vst.msk [vmem:[%s351 + $0x1a] sm:$0x3] %vm1282, %v1509
        %1921 = vst.msk [vmem:[%s351 + $0x1c] sm:$0x3] %vm1282, %v1506
        %1922 = vst.msk [vmem:[%s351 + $0x1e] sm:$0x3] %vm1282, %v1510
        %1923 = vst.msk [vmem:[%s351 + $0x20] sm:$0x3] %vm1282, %v1549
        %1924 = vst.msk [vmem:[%s351 + $0x22] sm:$0x3] %vm1282, %v1573
        %1925 = vst.msk [vmem:[%s351 + $0x24] sm:$0x3] %vm1282, %v1556
        %1926 = vst.msk [vmem:[%s351 + $0x26] sm:$0x3] %vm1282, %v1574
        %1927 = vst.msk [vmem:[%s351 + $0x28] sm:$0x3] %vm1282, %v1565
        %1928 = vst.msk [vmem:[%s351 + $0x2a] sm:$0x3] %vm1282, %v1575
        %1929 = vst.msk [vmem:[%s351 + $0x2c] sm:$0x3] %vm1282, %v1572
        %1930 = vst.msk [vmem:[%s351 + $0x2e] sm:$0x3] %vm1282, %v1576
        %1931 = vst.msk [vmem:[%s351 + $0x30] sm:$0x3] %vm1282, %v1615
        %1932 = vst.msk [vmem:[%s351 + $0x32] sm:$0x3] %vm1282, %v1639
        %1933 = vst.msk [vmem:[%s351 + $0x34] sm:$0x3] %vm1282, %v1622
        %1934 = vst.msk [vmem:[%s351 + $0x36] sm:$0x3] %vm1282, %v1640
        %1935 = vst.msk [vmem:[%s351 + $0x38] sm:$0x3] %vm1282, %v1631
        %1936 = vst.msk [vmem:[%s351 + $0x3a] sm:$0x3] %vm1282, %v1641
        %1937 = vst.msk [vmem:[%s351 + $0x3c] sm:$0x3] %vm1282, %v1638
        %1938 = vst.msk [vmem:[%s351 + $0x3e] sm:$0x3] %vm1282, %v1642
        %1939 = vst.msk [vmem:[%s351 + $0x40] sm:$0x3] %vm1282, %v1681
        %1940 = vst.msk [vmem:[%s351 + $0x42] sm:$0x3] %vm1282, %v1705
        %1941 = vst.msk [vmem:[%s351 + $0x44] sm:$0x3] %vm1282, %v1688
        %1942 = vst.msk [vmem:[%s351 + $0x46] sm:$0x3] %vm1282, %v1706
        %1943 = vst.msk [vmem:[%s351 + $0x48] sm:$0x3] %vm1282, %v1697
        %1944 = vst.msk [vmem:[%s351 + $0x4a] sm:$0x3] %vm1282, %v1707
        %1945 = vst.msk [vmem:[%s351 + $0x4c] sm:$0x3] %vm1282, %v1704
        %1946 = vst.msk [vmem:[%s351 + $0x4e] sm:$0x3] %vm1282, %v1708
        %1947 = vst.msk [vmem:[%s351 + $0x50] sm:$0x3] %vm1282, %v1747
        %1948 = vst.msk [vmem:[%s351 + $0x52] sm:$0x3] %vm1282, %v1771
        %1949 = vst.msk [vmem:[%s351 + $0x54] sm:$0x3] %vm1282, %v1754
        %1950 = vst.msk [vmem:[%s351 + $0x56] sm:$0x3] %vm1282, %v1772
        %1951 = vst.msk [vmem:[%s351 + $0x58] sm:$0x3] %vm1282, %v1763
        %1952 = vst.msk [vmem:[%s351 + $0x5a] sm:$0x3] %vm1282, %v1773
        %1953 = vst.msk [vmem:[%s351 + $0x5c] sm:$0x3] %vm1282, %v1770
        %1954 = vst.msk [vmem:[%s351 + $0x5e] sm:$0x3] %vm1282, %v1774
        %1955 = vst.msk [vmem:[%s351 + $0x60] sm:$0x3] %vm1282, %v1813
        %1956 = vst.msk [vmem:[%s351 + $0x62] sm:$0x3] %vm1282, %v1837
        %1957 = vst.msk [vmem:[%s351 + $0x64] sm:$0x3] %vm1282, %v1820
        %1958 = vst.msk [vmem:[%s351 + $0x66] sm:$0x3] %vm1282, %v1838
        %1959 = vst.msk [vmem:[%s351 + $0x68] sm:$0x3] %vm1282, %v1829
        %1960 = vst.msk [vmem:[%s351 + $0x6a] sm:$0x3] %vm1282, %v1839
        %1961 = vst.msk [vmem:[%s351 + $0x6c] sm:$0x3] %vm1282, %v1836
        %1962 = vst.msk [vmem:[%s351 + $0x6e] sm:$0x3] %vm1282, %v1840
        %1963 = vst.msk [vmem:[%s351 + $0x70] sm:$0x3] %vm1282, %v1879
        %1964 = vst.msk [vmem:[%s351 + $0x72] sm:$0x3] %vm1282, %v1903
        %1965 = vst.msk [vmem:[%s351 + $0x74] sm:$0x3] %vm1282, %v1886
        %1966 = vst.msk [vmem:[%s351 + $0x76] sm:$0x3] %vm1282, %v1904
        %1967 = vst.msk [vmem:[%s351 + $0x78] sm:$0x3] %vm1282, %v1895
        %1968 = vst.msk [vmem:[%s351 + $0x7a] sm:$0x3] %vm1282, %v1905
        %1969 = vst.msk [vmem:[%s351 + $0x7c] sm:$0x3] %vm1282, %v1902
        %1970 = vst.msk [vmem:[%s351 + $0x7e] sm:$0x3] %vm1282, %v1906
        %s1971 = smul.u32 64, %s27
        %p1972 = scmp.lt.s32.totalorder %s26, 1
        %s1973 = scalar_select %p1972, %s26, 1
        %p1974 = scmp.lt.s32.totalorder %s1971, 127
        %s1975 = scalar_select %p1974, %s1971, 127
        %s1976 = smul.addr %s1973, 128
        %s1977 = sadd.s32 %s1975, %s1976
        %s1978 = smul.addr %s1977, 2
        %s1979 = scalar_lea.vmem %s5, %s1978
        %s1980 = smul.u32 64, %s27
        %p1981 = scmp.lt.s32.totalorder %s26, 1
        %s1982 = scalar_select %p1981, %s26, 1
        %p1983 = scmp.lt.s32.totalorder %s1980, 127
        %s1984 = scalar_select %p1983, %s1980, 127
        %s1985 = smul.addr %s1982, 128
        %s1986 = sadd.s32 %s1984, %s1985
        %s1987 = smul.addr %s1986, 2
        %s1988 = scalar_lea.vmem %s6, %s1987
        // Predicated region
        $region53: #{tpu_custom_call.1} parent=39 // pred_check
          %p1989 = pneg %p166
        $region54: #{tpu_custom_call.1} parent=39 // pred_check_branch
          %1991 = sbr.rel (%p1989) target = $region56
        $region55: #{tpu_custom_call.1} parent=39 // pred_region
          %s1992 = smul.u32 64, %s27
        $region56: #{tpu_custom_call.1} parent=39 // pred_fallthru
          _
        // Predicated region
        $region57: #{tpu_custom_call.1} parent=39 // pred_check
          %p1993 = pneg %p194
        $region58: #{tpu_custom_call.1} parent=39 // pred_check_branch
          %1995 = sbr.rel (%p1993) target = $region60
        $region59: #{tpu_custom_call.1} parent=39 // pred_region
          %s1996 = smul.u32 64, %s27
        $region60: #{tpu_custom_call.1} parent=39 // pred_fallthru
          _
      $region40: #{tpu_custom_call.1} parent=5 // pred_fallthru
        _
      %p1997 = scmp.le.s32.totalorder 2, %s17
      // Predicated region
      $region61: #{tpu_custom_call.1} parent=5 // pred_check
        %p1998 = pneg %p1997
      $region62: #{tpu_custom_call.1} parent=5 // pred_check_branch
        %2000 = sbr.rel (%p1998) target = $region64
      $region63: #{tpu_custom_call.1} parent=5 // pred_region
        %s2001 = ssub.s32 %s17, 2
        // Predicated region
        $region65: #{tpu_custom_call.1} parent=63 // pred_check
          %p2002 = pneg %p172
        $region66: #{tpu_custom_call.1} parent=63 // pred_check_branch
          %2004 = sbr.rel (%p2002) target = $region68
        $region67: #{tpu_custom_call.1} parent=63 // pred_region
          %s2005 = smul.u32 64, %s29
          %p2006 = scmp.lt.s32.totalorder %s28, 1
          %s2007 = scalar_select %p2006, %s28, 1
          %p2008 = scmp.lt.s32.totalorder %s2005, 127
          %s2009 = scalar_select %p2008, %s2005, 127
          %s2010 = smul.addr %s2007, 128
          %s2011 = sadd.s32 %s2009, %s2010
          %s2012 = smul.addr %s2011, 2
          %s2013 = scalar_lea.vmem %s5, %s2012
        $region68: #{tpu_custom_call.1} parent=63 // pred_fallthru
          _
        // Predicated region
        $region69: #{tpu_custom_call.1} parent=63 // pred_check
          %p2014 = pneg %p200
        $region70: #{tpu_custom_call.1} parent=63 // pred_check_branch
          %2016 = sbr.rel (%p2014) target = $region72
        $region71: #{tpu_custom_call.1} parent=63 // pred_region
          %s2017 = smul.u32 64, %s29
          %p2018 = scmp.lt.s32.totalorder %s28, 1
          %s2019 = scalar_select %p2018, %s28, 1
          %p2020 = scmp.lt.s32.totalorder %s2017, 127
          %s2021 = scalar_select %p2020, %s2017, 127
          %s2022 = smul.addr %s2019, 128
          %s2023 = sadd.s32 %s2021, %s2022
          %s2024 = smul.addr %s2023, 2
          %s2025 = scalar_lea.vmem %s6, %s2024
        $region72: #{tpu_custom_call.1} parent=63 // pred_fallthru
          _
      $region64: #{tpu_custom_call.1} parent=5 // pred_fallthru
        _
    $region6: #{tpu_custom_call.1} parent=1 // loop_footer
      %s21 = sadd.s32 1, %s17
    $region7: #{tpu_custom_call.1} parent=1 // loop_footer_branch
      %16 = sbr.rel target = $region3
    $region8: #{tpu_custom_call.1} parent=1 // loop_exit
      _
    %2026 = vsyncpa [#allocation3], 1
    %s2027 = scalar_lea.sflag [#allocation3], 1
    %2028 = vsyncpa %s2027, 1
    %2029 = vsyncpa [#allocation5], 1

</llo_original>
